<compile_context>
chip_gen: v7x
topology: tpu7x:2x2x1
jax: 0.10.0
libtpu: 0.0.40
codegen_flags: <defaults>
</compile_context>

<pallas_src>
import math
import functools

import jax
import jax.numpy as jnp
from jax.experimental import pallas as pl
from jax.experimental.pallas import tpu as pltpu

EMBED = 48                      # embed_size (divisible by num_heads = 3)
NUM_HEADS = 3
HEAD_DIM = EMBED // NUM_HEADS
HIDDEN = 4 * EMBED
EPS = 1e-5

# Row offsets inside the packed weight slab `wbuf` (shape (7*EMBED, HIDDEN)).
_R_QKV = 0                      # (E, 3E)  fused [Wq^T*scale | Wk^T | Wv^T]
_R_WO = EMBED                   # (E, E)   out_proj.weight^T
_R_W1 = 2 * EMBED               # (E, 4E)  ff[0].weight^T
_R_W2 = 3 * EMBED               # (4E, E)  ff[3].weight^T
_WBUF_ROWS = 3 * EMBED + HIDDEN

# Row indices inside the packed bias/LN slab `vbuf` (shape (8, HIDDEN)).
_V_LN1W, _V_LN1B, _V_BQKV, _V_BO, _V_LN2W, _V_LN2B, _V_B1, _V_B2 = range(8)


def _layernorm(x, w, b):
    # One pass over x: var = E[x^2] - mu^2.
    mu = jnp.mean(x, axis=-1, keepdims=True)
    mu2 = jnp.mean(x * x, axis=-1, keepdims=True)
    var = mu2 - mu * mu
    return (x - mu) * jax.lax.rsqrt(var + EPS) * w + b


def _encoder_kernel(x_ref, wbuf_ref, vbuf_ref, o_ref, *, batch, seq):
    E, H, D, FF = EMBED, NUM_HEADS, HEAD_DIM, HIDDEN
    M = batch * seq

    # ---- static slices of the packed parameter slabs -----------------------
    w_qkv = wbuf_ref[_R_QKV:_R_QKV + E, 0:3 * E]          # (E, 3E)
    w_o = wbuf_ref[_R_WO:_R_WO + E, 0:E]                  # (E, E)
    w_1 = wbuf_ref[_R_W1:_R_W1 + E, 0:FF]                 # (E, 4E)
    w_2 = wbuf_ref[_R_W2:_R_W2 + FF, 0:E]                 # (4E, E)

    ln1_w = vbuf_ref[_V_LN1W:_V_LN1W + 1, 0:E]
    ln1_b = vbuf_ref[_V_LN1B:_V_LN1B + 1, 0:E]
    b_qkv = vbuf_ref[_V_BQKV:_V_BQKV + 1, 0:3 * E]
    b_o = vbuf_ref[_V_BO:_V_BO + 1, 0:E]
    ln2_w = vbuf_ref[_V_LN2W:_V_LN2W + 1, 0:E]
    ln2_b = vbuf_ref[_V_LN2B:_V_LN2B + 1, 0:E]
    b_1 = vbuf_ref[_V_B1:_V_B1 + 1, 0:FF]
    b_2 = vbuf_ref[_V_B2:_V_B2 + 1, 0:E]

    x = x_ref[...]                                        # (M, E)

    # ---- x = ln1(x) --------------------------------------------------------
    h = _layernorm(x, ln1_w, ln1_b)

    # ---- multi-head self-attention ----------------------------------------
    # TODO(synk): attention / ff / residual dropout omitted (eval-mode identity).
    # Fused Q/K/V projection; 1/sqrt(head_dim) is folded into the Q block.
    qkv = jnp.dot(h, w_qkv, preferred_element_type=jnp.float32) + b_qkv   # (M, 3E)

    def split_heads(col0):
        # (M, 3E) -> (H*B, S, D), batch-of-matmuls dim g = head*batch + b.
        return jnp.stack(
            [qkv[b * seq:(b + 1) * seq, col0 + i * D:col0 + (i + 1) * D]
             for i in range(H) for b in range(batch)], axis=0)

    q = split_heads(0)
    k = split_heads(E)
    v = split_heads(2 * E)

    s = jnp.einsum('gqd,gkd->gqk', q, k,
                   preferred_element_type=jnp.float32)     # (H*B, S, S)
    s = s - jnp.max(s, axis=-1, keepdims=True)
    p = jnp.exp(s)
    p = p * pl.reciprocal(jnp.sum(p, axis=-1, keepdims=True), approx=True)
    ctx = jnp.einsum('gqk,gkd->gqd', p, v,
                     preferred_element_type=jnp.float32)   # (H*B, S, D)

    # (H*B, S, D) -> (M, H*D): batches back on rows, heads concatenated on lanes.
    ctx_flat = jnp.concatenate(
        [jnp.concatenate([ctx[i * batch + b] for b in range(batch)], axis=0)
         for i in range(H)], axis=-1)                      # (M, E)

    attn = jnp.dot(ctx_flat, w_o, preferred_element_type=jnp.float32) + b_o
    h = h + attn                                           # residual 1

    # ---- feed-forward ------------------------------------------------------
    g = _layernorm(h, ln2_w, ln2_b)
    f = jnp.dot(g, w_1, preferred_element_type=jnp.float32) + b_1
    # tanh-approximate GELU (EUP); nn.GELU() default is exact erf.
    # TODO(synk): switch back to exact-erf GELU if bit-fidelity is required.
    f = jax.nn.gelu(f, approximate=True)
    f = jnp.dot(f, w_2, preferred_element_type=jnp.float32) + b_2

    o_ref[...] = h + f                                     # residual 2


# ---------------------------------------------------------------------------
# Parameter construction / packing
# ---------------------------------------------------------------------------
def init_params(key, embed=EMBED):
    """PyTorch-layout Encoder parameters (nn.MultiheadAttention conventions)."""
    std = 0.02
    ks = jax.random.split(key, 8)
    return {
        "ln1_w": jnp.ones((embed,), jnp.float32),
        "ln1_b": jnp.zeros((embed,), jnp.float32),
        "in_proj_w": std * jax.random.normal(ks[0], (3 * embed, embed), jnp.float32),
        "in_proj_b": std * jax.random.normal(ks[1], (3 * embed,), jnp.float32),
        "out_proj_w": std * jax.random.normal(ks[2], (embed, embed), jnp.float32),
        "out_proj_b": std * jax.random.normal(ks[3], (embed,), jnp.float32),
        "ln2_w": jnp.ones((embed,), jnp.float32),
        "ln2_b": jnp.zeros((embed,), jnp.float32),
        "ff1_w": std * jax.random.normal(ks[4], (4 * embed, embed), jnp.float32),
        "ff1_b": std * jax.random.normal(ks[5], (4 * embed,), jnp.float32),
        "ff2_w": std * jax.random.normal(ks[6], (embed, 4 * embed), jnp.float32),
        "ff2_b": std * jax.random.normal(ks[7], (embed,), jnp.float32),
    }


def pack_params(p, embed=EMBED, num_heads=NUM_HEADS):
    """Pack all 16 parameter arrays into two contiguous f32 slabs."""
    d = embed // num_heads
    hid = 4 * embed
    scale = 1.0 / math.sqrt(d)

    wq, wk, wv = jnp.split(p["in_proj_w"], 3, axis=0)      # each (E, E)
    bq, bk, bv = jnp.split(p["in_proj_b"], 3, axis=0)

    # x @ W^T convention; softmax scale folded into the Q block.
    w_qkv = jnp.concatenate([wq.T * scale, wk.T, wv.T], axis=1)   # (E, 3E)
    b_qkv = jnp.concatenate([bq * scale, bk, bv], axis=0)         # (3E,)

    wbuf = jnp.zeros((_WBUF_ROWS, hid), jnp.float32)
    wbuf = wbuf.at[_R_QKV:_R_QKV + embed, 0:3 * embed].set(w_qkv)
    wbuf = wbuf.at[_R_WO:_R_WO + embed, 0:embed].set(p["out_proj_w"].T)
    wbuf = wbuf.at[_R_W1:_R_W1 + embed, 0:hid].set(p["ff1_w"].T)
    wbuf = wbuf.at[_R_W2:_R_W2 + hid, 0:embed].set(p["ff2_w"].T)

    vbuf = jnp.zeros((8, hid), jnp.float32)
    vbuf = vbuf.at[_V_LN1W, 0:embed].set(p["ln1_w"])
    vbuf = vbuf.at[_V_LN1B, 0:embed].set(p["ln1_b"])
    vbuf = vbuf.at[_V_BQKV, 0:3 * embed].set(b_qkv)
    vbuf = vbuf.at[_V_BO, 0:embed].set(p["out_proj_b"])
    vbuf = vbuf.at[_V_LN2W, 0:embed].set(p["ln2_w"])
    vbuf = vbuf.at[_V_LN2B, 0:embed].set(p["ln2_b"])
    vbuf = vbuf.at[_V_B1, 0:hid].set(p["ff1_b"])
    vbuf = vbuf.at[_V_B2, 0:embed].set(p["ff2_b"])
    return {"wbuf": wbuf, "vbuf": vbuf}


# ---------------------------------------------------------------------------
# Wrapper
# ---------------------------------------------------------------------------
def encoder_forward(x, packed):
    B, S, E = x.shape
    assert E == EMBED
    x2d = x.reshape(B * S, E)                   # flatten rows for the matmuls

    kernel = functools.partial(_encoder_kernel, batch=B, seq=S)
    vmem = lambda: pl.BlockSpec(memory_space=pltpu.MemorySpace.VMEM)

    out2d = pl.pallas_call(
        kernel,
        out_shape=jax.ShapeDtypeStruct((B * S, E), x.dtype),
        in_specs=[vmem(), vmem(), vmem()],
        out_specs=vmem(),
    )(x2d, packed["wbuf"], packed["vbuf"])
    return out2d.reshape(B, S, E)


# ---------------------------------------------------------------------------
# Pure-JAX reference (PyTorch-equivalent math) for a sanity check
# ---------------------------------------------------------------------------
def encoder_reference(x, p):
    B, S, E = x.shape
    H, D = NUM_HEADS, HEAD_DIM

    def ln(t, w, b):
        mu = t.mean(-1, keepdims=True)
        var = ((t - mu) ** 2).mean(-1, keepdims=True)
        return (t - mu) / jnp.sqrt(var + EPS) * w + b

    h = ln(x, p["ln1_w"], p["ln1_b"])
    qkv = h @ p["in_proj_w"].T + p["in_proj_b"]
    q, k, v = qkv[..., :E], qkv[..., E:2 * E], qkv[..., 2 * E:]
    q = q.reshape(B, S, H, D).transpose(0, 2, 1, 3)
    k = k.reshape(B, S, H, D).transpose(0, 2, 1, 3)
    v = v.reshape(B, S, H, D).transpose(0, 2, 1, 3)
    s = jnp.einsum('bhqd,bhkd->bhqk', q, k) / math.sqrt(D)
    a = jax.nn.softmax(s, axis=-1)
    ctx = jnp.einsum('bhqk,bhkd->bhqd', a, v).transpose(0, 2, 1, 3).reshape(B, S, E)
    h = h + ctx @ p["out_proj_w"].T + p["out_proj_b"]
    g = ln(h, p["ln2_w"], p["ln2_b"])
    f = jax.nn.gelu(g @ p["ff1_w"].T + p["ff1_b"], approximate=True)
    f = f @ p["ff2_w"].T + p["ff2_b"]
    return h + f


if __name__ == "__main__":
    key = jax.random.PRNGKey(0)
    kx, kp = jax.random.split(key)

    B, S = 2, 8
    x = jax.random.normal(kx, (B, S, EMBED), jnp.float32)
    params = init_params(kp)
    packed = pack_params(params)

    out = encoder_forward(x, packed)
    jax.block_until_ready(out)

    assert out.shape == (B, S, EMBED)
    assert bool(jnp.all(jnp.isfinite(out)))

    with jax.default_matmul_precision("highest"):
        ref = encoder_reference(x, params)
    err = float(jnp.max(jnp.abs(out - ref)))
    assert err < 2e-2, f"max abs err vs reference: {err}"

    print("KERNEL_OK")
</pallas_src>

<mosaic_0001>
module attributes {stable_mosaic.version = 11 : i64} {
  func.func @_encoder_kernel(%arg0: memref<16x48xf32, #tpu.memory_space<vmem>>, %arg1: memref<336x192xf32, #tpu.memory_space<vmem>>, %arg2: memref<8x192xf32, #tpu.memory_space<vmem>>, %arg3: memref<16x48xf32, #tpu.memory_space<vmem>>) attributes {dimension_semantics = [], scalar_prefetch = 0 : i64, scratch_operands = 0 : i64, tpu.core_type = #tpu.core_type<tc>} {
    %c0 = arith.constant 0 : index
    %c0_0 = arith.constant 0 : index
    %0 = vector.load %arg1[%c0, %c0_0] : memref<336x192xf32, #tpu.memory_space<vmem>>, vector<48x144xf32>
    %c48 = arith.constant 48 : index
    %c0_1 = arith.constant 0 : index
    %1 = vector.load %arg1[%c48, %c0_1] : memref<336x192xf32, #tpu.memory_space<vmem>>, vector<48x48xf32>
    %c96 = arith.constant 96 : index
    %c0_2 = arith.constant 0 : index
    %2 = vector.load %arg1[%c96, %c0_2] : memref<336x192xf32, #tpu.memory_space<vmem>>, vector<48x192xf32>
    %c144 = arith.constant 144 : index
    %c0_3 = arith.constant 0 : index
    %3 = vector.load %arg1[%c144, %c0_3] : memref<336x192xf32, #tpu.memory_space<vmem>>, vector<192x48xf32>
    %c0_4 = arith.constant 0 : index
    %c0_5 = arith.constant 0 : index
    %4 = vector.load %arg2[%c0_4, %c0_5] : memref<8x192xf32, #tpu.memory_space<vmem>>, vector<1x48xf32>
    %c1 = arith.constant 1 : index
    %c0_6 = arith.constant 0 : index
    %5 = vector.load %arg2[%c1, %c0_6] : memref<8x192xf32, #tpu.memory_space<vmem>>, vector<1x48xf32>
    %c2 = arith.constant 2 : index
    %c0_7 = arith.constant 0 : index
    %6 = vector.load %arg2[%c2, %c0_7] : memref<8x192xf32, #tpu.memory_space<vmem>>, vector<1x144xf32>
    %c3 = arith.constant 3 : index
    %c0_8 = arith.constant 0 : index
    %7 = vector.load %arg2[%c3, %c0_8] : memref<8x192xf32, #tpu.memory_space<vmem>>, vector<1x48xf32>
    %c4 = arith.constant 4 : index
    %c0_9 = arith.constant 0 : index
    %8 = vector.load %arg2[%c4, %c0_9] : memref<8x192xf32, #tpu.memory_space<vmem>>, vector<1x48xf32>
    %c5 = arith.constant 5 : index
    %c0_10 = arith.constant 0 : index
    %9 = vector.load %arg2[%c5, %c0_10] : memref<8x192xf32, #tpu.memory_space<vmem>>, vector<1x48xf32>
    %c6 = arith.constant 6 : index
    %c0_11 = arith.constant 0 : index
    %10 = vector.load %arg2[%c6, %c0_11] : memref<8x192xf32, #tpu.memory_space<vmem>>, vector<1x192xf32>
    %c7 = arith.constant 7 : index
    %c0_12 = arith.constant 0 : index
    %11 = vector.load %arg2[%c7, %c0_12] : memref<8x192xf32, #tpu.memory_space<vmem>>, vector<1x48xf32>
    %c0_13 = arith.constant 0 : index
    %c0_14 = arith.constant 0 : index
    %12 = vector.load %arg0[%c0_13, %c0_14] : memref<16x48xf32, #tpu.memory_space<vmem>>, vector<16x48xf32>
    %cst = arith.constant dense<0.000000e+00> : vector<16xf32>
    %13 = vector.multi_reduction <add>, %12, %cst [1] : vector<16x48xf32> to vector<16xf32>
    %14 = vector.shape_cast %13 : vector<16xf32> to vector<16x1xf32>
    %cst_15 = arith.constant 4.800000e+01 : f32
    %15 = vector.broadcast %cst_15 : f32 to vector<16x1xf32>
    %16 = arith.divf %14, %15 : vector<16x1xf32>
    %17 = arith.mulf %12, %12 : vector<16x48xf32>
    %cst_16 = arith.constant dense<0.000000e+00> : vector<16xf32>
    %18 = vector.multi_reduction <add>, %17, %cst_16 [1] : vector<16x48xf32> to vector<16xf32>
    %19 = vector.shape_cast %18 : vector<16xf32> to vector<16x1xf32>
    %cst_17 = arith.constant 4.800000e+01 : f32
    %20 = vector.broadcast %cst_17 : f32 to vector<16x1xf32>
    %21 = arith.divf %19, %20 : vector<16x1xf32>
    %22 = arith.mulf %16, %16 : vector<16x1xf32>
    %23 = arith.subf %21, %22 : vector<16x1xf32>
    %24 = vector.broadcast %16 : vector<16x1xf32> to vector<16x48xf32>
    %25 = arith.subf %12, %24 : vector<16x48xf32>
    %cst_18 = arith.constant 9.99999974E-6 : f32
    %26 = vector.broadcast %cst_18 : f32 to vector<16x1xf32>
    %27 = arith.addf %23, %26 : vector<16x1xf32>
    %28 = math.rsqrt %27 : vector<16x1xf32>
    %29 = vector.broadcast %28 : vector<16x1xf32> to vector<16x48xf32>
    %30 = arith.mulf %25, %29 : vector<16x48xf32>
    %31 = vector.broadcast %4 : vector<1x48xf32> to vector<16x48xf32>
    %32 = arith.mulf %30, %31 : vector<16x48xf32>
    %33 = vector.broadcast %5 : vector<1x48xf32> to vector<16x48xf32>
    %34 = arith.addf %32, %33 : vector<16x48xf32>
    %cst_19 = arith.constant dense<0.000000e+00> : vector<16x144xf32>
    %35 = tpu.matmul %34, %0, %cst_19 {dimension_numbers = #tpu.dot_dimension_numbers<[1], [0], [0], [1], [0, 0, 1, 1], [], []>} : vector<16x48xf32>, vector<48x144xf32>, vector<16x144xf32> -> vector<16x144xf32>
    %36 = vector.broadcast %6 : vector<1x144xf32> to vector<16x144xf32>
    %37 = arith.addf %35, %36 : vector<16x144xf32>
    %38 = vector.extract_strided_slice %37 {offsets = [0, 0], sizes = [8, 16], strides = [1, 1]} : vector<16x144xf32> to vector<8x16xf32>
    %39 = vector.extract_strided_slice %37 {offsets = [8, 0], sizes = [8, 16], strides = [1, 1]} : vector<16x144xf32> to vector<8x16xf32>
    %40 = vector.extract_strided_slice %37 {offsets = [0, 16], sizes = [8, 16], strides = [1, 1]} : vector<16x144xf32> to vector<8x16xf32>
    %41 = vector.extract_strided_slice %37 {offsets = [8, 16], sizes = [8, 16], strides = [1, 1]} : vector<16x144xf32> to vector<8x16xf32>
    %42 = vector.extract_strided_slice %37 {offsets = [0, 32], sizes = [8, 16], strides = [1, 1]} : vector<16x144xf32> to vector<8x16xf32>
    %43 = vector.extract_strided_slice %37 {offsets = [8, 32], sizes = [8, 16], strides = [1, 1]} : vector<16x144xf32> to vector<8x16xf32>
    %44 = vector.shape_cast %38 : vector<8x16xf32> to vector<1x8x16xf32>
    %45 = vector.shape_cast %39 : vector<8x16xf32> to vector<1x8x16xf32>
    %46 = vector.shape_cast %40 : vector<8x16xf32> to vector<1x8x16xf32>
    %47 = vector.shape_cast %41 : vector<8x16xf32> to vector<1x8x16xf32>
    %48 = vector.shape_cast %42 : vector<8x16xf32> to vector<1x8x16xf32>
    %49 = vector.shape_cast %43 : vector<8x16xf32> to vector<1x8x16xf32>
    %50 = tpu.concatenate %44, %45, %46, %47, %48, %49 in 0 : vector<1x8x16xf32>, vector<1x8x16xf32>, vector<1x8x16xf32>, vector<1x8x16xf32>, vector<1x8x16xf32>, vector<1x8x16xf32> -> vector<6x8x16xf32>
    %51 = vector.extract_strided_slice %37 {offsets = [0, 48], sizes = [8, 16], strides = [1, 1]} : vector<16x144xf32> to vector<8x16xf32>
    %52 = vector.extract_strided_slice %37 {offsets = [8, 48], sizes = [8, 16], strides = [1, 1]} : vector<16x144xf32> to vector<8x16xf32>
    %53 = vector.extract_strided_slice %37 {offsets = [0, 64], sizes = [8, 16], strides = [1, 1]} : vector<16x144xf32> to vector<8x16xf32>
    %54 = vector.extract_strided_slice %37 {offsets = [8, 64], sizes = [8, 16], strides = [1, 1]} : vector<16x144xf32> to vector<8x16xf32>
    %55 = vector.extract_strided_slice %37 {offsets = [0, 80], sizes = [8, 16], strides = [1, 1]} : vector<16x144xf32> to vector<8x16xf32>
    %56 = vector.extract_strided_slice %37 {offsets = [8, 80], sizes = [8, 16], strides = [1, 1]} : vector<16x144xf32> to vector<8x16xf32>
    %57 = vector.shape_cast %51 : vector<8x16xf32> to vector<1x8x16xf32>
    %58 = vector.shape_cast %52 : vector<8x16xf32> to vector<1x8x16xf32>
    %59 = vector.shape_cast %53 : vector<8x16xf32> to vector<1x8x16xf32>
    %60 = vector.shape_cast %54 : vector<8x16xf32> to vector<1x8x16xf32>
    %61 = vector.shape_cast %55 : vector<8x16xf32> to vector<1x8x16xf32>
    %62 = vector.shape_cast %56 : vector<8x16xf32> to vector<1x8x16xf32>
    %63 = tpu.concatenate %57, %58, %59, %60, %61, %62 in 0 : vector<1x8x16xf32>, vector<1x8x16xf32>, vector<1x8x16xf32>, vector<1x8x16xf32>, vector<1x8x16xf32>, vector<1x8x16xf32> -> vector<6x8x16xf32>
    %64 = vector.extract_strided_slice %37 {offsets = [0, 96], sizes = [8, 16], strides = [1, 1]} : vector<16x144xf32> to vector<8x16xf32>
    %65 = vector.extract_strided_slice %37 {offsets = [8, 96], sizes = [8, 16], strides = [1, 1]} : vector<16x144xf32> to vector<8x16xf32>
    %66 = vector.extract_strided_slice %37 {offsets = [0, 112], sizes = [8, 16], strides = [1, 1]} : vector<16x144xf32> to vector<8x16xf32>
    %67 = vector.extract_strided_slice %37 {offsets = [8, 112], sizes = [8, 16], strides = [1, 1]} : vector<16x144xf32> to vector<8x16xf32>
    %68 = vector.extract_strided_slice %37 {offsets = [0, 128], sizes = [8, 16], strides = [1, 1]} : vector<16x144xf32> to vector<8x16xf32>
    %69 = vector.extract_strided_slice %37 {offsets = [8, 128], sizes = [8, 16], strides = [1, 1]} : vector<16x144xf32> to vector<8x16xf32>
    %70 = vector.shape_cast %64 : vector<8x16xf32> to vector<1x8x16xf32>
    %71 = vector.shape_cast %65 : vector<8x16xf32> to vector<1x8x16xf32>
    %72 = vector.shape_cast %66 : vector<8x16xf32> to vector<1x8x16xf32>
    %73 = vector.shape_cast %67 : vector<8x16xf32> to vector<1x8x16xf32>
    %74 = vector.shape_cast %68 : vector<8x16xf32> to vector<1x8x16xf32>
    %75 = vector.shape_cast %69 : vector<8x16xf32> to vector<1x8x16xf32>
    %76 = tpu.concatenate %70, %71, %72, %73, %74, %75 in 0 : vector<1x8x16xf32>, vector<1x8x16xf32>, vector<1x8x16xf32>, vector<1x8x16xf32>, vector<1x8x16xf32>, vector<1x8x16xf32> -> vector<6x8x16xf32>
    "tpu.trace_start"() <{level = 10 : i32, message = "gqd,gkd->gqk"}> : () -> ()
    %cst_20 = arith.constant dense<0.000000e+00> : vector<6x8x8xf32>
    %77 = tpu.matmul %50, %63, %cst_20 {dimension_numbers = #tpu.dot_dimension_numbers<[2], [2], [1], [1], [0, 0, 0, 1, 1, 1], [0], [0]>} : vector<6x8x16xf32>, vector<6x8x16xf32>, vector<6x8x8xf32> -> vector<6x8x8xf32>
    "tpu.trace_stop"() : () -> ()
    %cst_21 = arith.constant dense<0xFF800000> : vector<6x8xf32>
    %78 = vector.multi_reduction <maximumf>, %77, %cst_21 [2] : vector<6x8x8xf32> to vector<6x8xf32>
    %79 = vector.shape_cast %78 : vector<6x8xf32> to vector<6x8x1xf32>
    %80 = vector.broadcast %79 : vector<6x8x1xf32> to vector<6x8x8xf32>
    %81 = arith.subf %77, %80 : vector<6x8x8xf32>
    %82 = math.exp %81 : vector<6x8x8xf32>
    %cst_22 = arith.constant dense<0.000000e+00> : vector<6x8xf32>
    %83 = vector.multi_reduction <add>, %82, %cst_22 [2] : vector<6x8x8xf32> to vector<6x8xf32>
    %84 = vector.shape_cast %83 : vector<6x8xf32> to vector<6x8x1xf32>
    %85 = tpu.reciprocal %84 {approx = true} : vector<6x8x1xf32> -> vector<6x8x1xf32>
    %86 = vector.broadcast %85 : vector<6x8x1xf32> to vector<6x8x8xf32>
    %87 = arith.mulf %82, %86 : vector<6x8x8xf32>
    "tpu.trace_start"() <{level = 10 : i32, message = "gqk,gkd->gqd"}> : () -> ()
    %cst_23 = arith.constant dense<0.000000e+00> : vector<6x8x16xf32>
    %88 = tpu.matmul %87, %76, %cst_23 {dimension_numbers = #tpu.dot_dimension_numbers<[2], [1], [1], [2], [0, 0, 0, 1, 1, 2], [0], [0]>} : vector<6x8x8xf32>, vector<6x8x16xf32>, vector<6x8x16xf32> -> vector<6x8x16xf32>
    "tpu.trace_stop"() : () -> ()
    %89 = vector.extract_strided_slice %88 {offsets = [0, 0, 0], sizes = [1, 8, 16], strides = [1, 1, 1]} : vector<6x8x16xf32> to vector<1x8x16xf32>
    %90 = vector.shape_cast %89 : vector<1x8x16xf32> to vector<8x16xf32>
    %91 = vector.extract_strided_slice %88 {offsets = [1, 0, 0], sizes = [1, 8, 16], strides = [1, 1, 1]} : vector<6x8x16xf32> to vector<1x8x16xf32>
    %92 = vector.shape_cast %91 : vector<1x8x16xf32> to vector<8x16xf32>
    %93 = tpu.concatenate %90, %92 in 0 : vector<8x16xf32>, vector<8x16xf32> -> vector<16x16xf32>
    %94 = vector.extract_strided_slice %88 {offsets = [2, 0, 0], sizes = [1, 8, 16], strides = [1, 1, 1]} : vector<6x8x16xf32> to vector<1x8x16xf32>
    %95 = vector.shape_cast %94 : vector<1x8x16xf32> to vector<8x16xf32>
    %96 = vector.extract_strided_slice %88 {offsets = [3, 0, 0], sizes = [1, 8, 16], strides = [1, 1, 1]} : vector<6x8x16xf32> to vector<1x8x16xf32>
    %97 = vector.shape_cast %96 : vector<1x8x16xf32> to vector<8x16xf32>
    %98 = tpu.concatenate %95, %97 in 0 : vector<8x16xf32>, vector<8x16xf32> -> vector<16x16xf32>
    %99 = vector.extract_strided_slice %88 {offsets = [4, 0, 0], sizes = [1, 8, 16], strides = [1, 1, 1]} : vector<6x8x16xf32> to vector<1x8x16xf32>
    %100 = vector.shape_cast %99 : vector<1x8x16xf32> to vector<8x16xf32>
    %101 = vector.extract_strided_slice %88 {offsets = [5, 0, 0], sizes = [1, 8, 16], strides = [1, 1, 1]} : vector<6x8x16xf32> to vector<1x8x16xf32>
    %102 = vector.shape_cast %101 : vector<1x8x16xf32> to vector<8x16xf32>
    %103 = tpu.concatenate %100, %102 in 0 : vector<8x16xf32>, vector<8x16xf32> -> vector<16x16xf32>
    %104 = tpu.concatenate %93, %98, %103 in 1 : vector<16x16xf32>, vector<16x16xf32>, vector<16x16xf32> -> vector<16x48xf32>
    %cst_24 = arith.constant dense<0.000000e+00> : vector<16x48xf32>
    %105 = tpu.matmul %104, %1, %cst_24 {dimension_numbers = #tpu.dot_dimension_numbers<[1], [0], [0], [1], [0, 0, 1, 1], [], []>} : vector<16x48xf32>, vector<48x48xf32>, vector<16x48xf32> -> vector<16x48xf32>
    %106 = vector.broadcast %7 : vector<1x48xf32> to vector<16x48xf32>
    %107 = arith.addf %105, %106 : vector<16x48xf32>
    %108 = arith.addf %34, %107 : vector<16x48xf32>
    %cst_25 = arith.constant dense<0.000000e+00> : vector<16xf32>
    %109 = vector.multi_reduction <add>, %108, %cst_25 [1] : vector<16x48xf32> to vector<16xf32>
    %110 = vector.shape_cast %109 : vector<16xf32> to vector<16x1xf32>
    %cst_26 = arith.constant 4.800000e+01 : f32
    %111 = vector.broadcast %cst_26 : f32 to vector<16x1xf32>
    %112 = arith.divf %110, %111 : vector<16x1xf32>
    %113 = arith.mulf %108, %108 : vector<16x48xf32>
    %cst_27 = arith.constant dense<0.000000e+00> : vector<16xf32>
    %114 = vector.multi_reduction <add>, %113, %cst_27 [1] : vector<16x48xf32> to vector<16xf32>
    %115 = vector.shape_cast %114 : vector<16xf32> to vector<16x1xf32>
    %cst_28 = arith.constant 4.800000e+01 : f32
    %116 = vector.broadcast %cst_28 : f32 to vector<16x1xf32>
    %117 = arith.divf %115, %116 : vector<16x1xf32>
    %118 = arith.mulf %112, %112 : vector<16x1xf32>
    %119 = arith.subf %117, %118 : vector<16x1xf32>
    %120 = vector.broadcast %112 : vector<16x1xf32> to vector<16x48xf32>
    %121 = arith.subf %108, %120 : vector<16x48xf32>
    %cst_29 = arith.constant 9.99999974E-6 : f32
    %122 = vector.broadcast %cst_29 : f32 to vector<16x1xf32>
    %123 = arith.addf %119, %122 : vector<16x1xf32>
    %124 = math.rsqrt %123 : vector<16x1xf32>
    %125 = vector.broadcast %124 : vector<16x1xf32> to vector<16x48xf32>
    %126 = arith.mulf %121, %125 : vector<16x48xf32>
    %127 = vector.broadcast %8 : vector<1x48xf32> to vector<16x48xf32>
    %128 = arith.mulf %126, %127 : vector<16x48xf32>
    %129 = vector.broadcast %9 : vector<1x48xf32> to vector<16x48xf32>
    %130 = arith.addf %128, %129 : vector<16x48xf32>
    %cst_30 = arith.constant dense<0.000000e+00> : vector<16x192xf32>
    %131 = tpu.matmul %130, %2, %cst_30 {dimension_numbers = #tpu.dot_dimension_numbers<[1], [0], [0], [1], [0, 0, 1, 1], [], []>} : vector<16x48xf32>, vector<48x192xf32>, vector<16x192xf32> -> vector<16x192xf32>
    %132 = vector.broadcast %10 : vector<1x192xf32> to vector<16x192xf32>
    %133 = arith.addf %131, %132 : vector<16x192xf32>
    %134 = arith.mulf %133, %133 : vector<16x192xf32>
    %135 = arith.mulf %133, %134 : vector<16x192xf32>
    %cst_31 = arith.constant 4.471500e-02 : f32
    %136 = vector.broadcast %cst_31 : f32 to vector<16x192xf32>
    %137 = arith.mulf %136, %135 : vector<16x192xf32>
    %138 = arith.addf %133, %137 : vector<16x192xf32>
    %cst_32 = arith.constant 0.797884583 : f32
    %139 = vector.broadcast %cst_32 : f32 to vector<16x192xf32>
    %140 = arith.mulf %139, %138 : vector<16x192xf32>
    %141 = math.tanh %140 : vector<16x192xf32>
    %cst_33 = arith.constant 1.000000e+00 : f32
    %142 = vector.broadcast %cst_33 : f32 to vector<16x192xf32>
    %143 = arith.addf %142, %141 : vector<16x192xf32>
    %cst_34 = arith.constant 5.000000e-01 : f32
    %144 = vector.broadcast %cst_34 : f32 to vector<16x192xf32>
    %145 = arith.mulf %144, %143 : vector<16x192xf32>
    %146 = arith.mulf %133, %145 : vector<16x192xf32>
    %cst_35 = arith.constant dense<0.000000e+00> : vector<16x48xf32>
    %147 = tpu.matmul %146, %3, %cst_35 {dimension_numbers = #tpu.dot_dimension_numbers<[1], [0], [0], [1], [0, 0, 1, 1], [], []>} : vector<16x192xf32>, vector<192x48xf32>, vector<16x48xf32> -> vector<16x48xf32>
    %148 = vector.broadcast %11 : vector<1x48xf32> to vector<16x48xf32>
    %149 = arith.addf %147, %148 : vector<16x48xf32>
    %150 = arith.addf %108, %149 : vector<16x48xf32>
    %c0_36 = arith.constant 0 : index
    %c0_37 = arith.constant 0 : index
    %151 = vector.load %arg3[%c0_36, %c0_37] : memref<16x48xf32, #tpu.memory_space<vmem>>, vector<16x48xf32>
    tpu.vector_store %arg3[%c0_36, %c0_37], %150 {strides = array<i32>} : memref<16x48xf32, #tpu.memory_space<vmem>>, vector<16x48xf32>,
    return
  }
}

</mosaic_0001>

<llo_original>
// kernel: tpu_custom_call.1
$region0: #{tpu_custom_call.1}
  #allocation0 [shape = 'u32[]', space=smem, size = 0x4, offset = 0x4, fixed_abs, tag = 'smem constant byte address 0x4 - core index']
  #allocation1 [shape = 'u32[144,128]{1,0:T(1,128)}', space=vmem, size = 0x12000, scoped, tag = 'internal scratch']
  %s0 = inlined_call_operand.vmem [shape: f32[16,48], index: 0, kind: input, shape index: {}]
  %s1 = inlined_call_operand.vmem [shape: f32[336,192], index: 1, kind: input, shape index: {}]
  %s2 = inlined_call_operand.vmem [shape: f32[8,192], index: 2, kind: input, shape index: {}]
  %s3 = inlined_call_operand.hbm [shape: f32[16,48], index: 3, kind: output, shape index: {}]
  %s4 = sld [smem:[#allocation0]]
  $region22: #{tpu_custom_call.1} parent=0
    _
  %s6 = ssub.s32 1, %s4
  %s7 = scalar_select 0, %s6, %s4
  $region1: #{tpu_custom_call.1} parent=0
    #allocation2 [shape = 'u8[8192]{0}', space=vmem, size = 0x2000, scoped, tag = 'output window, operand 0, single buffered']
    #allocation3 [shape = 's32[1]{0}', space=sflag, size = 0x4, scoped, tag = 'scoped memory for tpu_custom_call.1']
    %8 = vsyncpa [#allocation3], 0
    // Predicated region
    $region2: #{tpu_custom_call.1} parent=1 // pred_check
      _
    $region3: #{tpu_custom_call.1} parent=1 // pred_check_branch
      %10 = sbr.rel (0) target = $region5
    $region4: #{tpu_custom_call.1} parent=1 // pred_region
      _
    $region5: #{tpu_custom_call.1} parent=1 // pred_fallthru
      _
    // Predicated region
    $region6: #{tpu_custom_call.1} parent=1 // pred_check
      _
    $region7: #{tpu_custom_call.1} parent=1 // pred_check_branch
      %12 = sbr.rel (0) target = $region9
    $region8: #{tpu_custom_call.1} parent=1 // pred_region
      _
    $region9: #{tpu_custom_call.1} parent=1 // pred_fallthru
      _
    // Predicated region
    $region10: #{tpu_custom_call.1} parent=1 // pred_check
      _
    $region11: #{tpu_custom_call.1} parent=1 // pred_check_branch
      %14 = sbr.rel (0) target = $region13
    $region12: #{tpu_custom_call.1} parent=1 // pred_region
      _
    $region13: #{tpu_custom_call.1} parent=1 // pred_fallthru
      _
    %v15 = vld [vmem:[%s1] sm:$0xff]
    %v16 = vld [vmem:[%s1 + $0x8] sm:$0xff]
    %v17 = vld [vmem:[%s1 + $0x10] sm:$0xff]
    %v18 = vld [vmem:[%s1 + $0x18] sm:$0xff]
    %v19 = vld [vmem:[%s1 + $0x20] sm:$0xff]
    %v20 = vld [vmem:[%s1 + $0x28] sm:$0xff]
    %v21 = vld [vmem:[%s1 + $0x30] sm:$0xff]
    %v22 = vld [vmem:[%s1 + $0x38] sm:$0xff]
    %v23 = vld [vmem:[%s1 + $0x40] sm:$0xff]
    %v24 = vld [vmem:[%s1 + $0x48] sm:$0xff]
    %v25 = vld [vmem:[%s1 + $0x50] sm:$0xff]
    %v26 = vld [vmem:[%s1 + $0x58] sm:$0xff]
    %v27 = vld [vmem:[%s1 + $0x60] sm:$0xff]
    %v28 = vld [vmem:[%s1 + $0x70] sm:$0xff]
    %v29 = vld [vmem:[%s1 + $0x80] sm:$0xff]
    %v30 = vld [vmem:[%s1 + $0x90] sm:$0xff]
    %v31 = vld [vmem:[%s1 + $0xa0] sm:$0xff]
    %v32 = vld [vmem:[%s1 + $0xb0] sm:$0xff]
    %v33 = vld [vmem:[%s1 + $0xc0] sm:$0xff]
    %v34 = vld [vmem:[%s1 + $0xc8] sm:$0xff]
    %v35 = vld [vmem:[%s1 + $0xd0] sm:$0xff]
    %v36 = vld [vmem:[%s1 + $0xd8] sm:$0xff]
    %v37 = vld [vmem:[%s1 + $0xe0] sm:$0xff]
    %v38 = vld [vmem:[%s1 + $0xe8] sm:$0xff]
    %v39 = vld [vmem:[%s1 + $0xf0] sm:$0xff]
    %v40 = vld [vmem:[%s1 + $0xf8] sm:$0xff]
    %v41 = vld [vmem:[%s1 + $0x100] sm:$0xff]
    %v42 = vld [vmem:[%s1 + $0x108] sm:$0xff]
    %v43 = vld [vmem:[%s1 + $0x110] sm:$0xff]
    %v44 = vld [vmem:[%s1 + $0x118] sm:$0xff]
    %v45 = vld [vmem:[%s1 + $0x120] sm:$0xff]
    %v46 = vld [vmem:[%s1 + $0x130] sm:$0xff]
    %v47 = vld [vmem:[%s1 + $0x140] sm:$0xff]
    %v48 = vld [vmem:[%s1 + $0x150] sm:$0xff]
    %v49 = vld [vmem:[%s1 + $0x160] sm:$0xff]
    %v50 = vld [vmem:[%s1 + $0x170] sm:$0xff]
    %v51 = vld [vmem:[%s1 + $0x180] sm:$0xff]
    %v52 = vld [vmem:[%s1 + $0x190] sm:$0xff]
    %v53 = vld [vmem:[%s1 + $0x1a0] sm:$0xff]
    %v54 = vld [vmem:[%s1 + $0x1b0] sm:$0xff]
    %v55 = vld [vmem:[%s1 + $0x1c0] sm:$0xff]
    %v56 = vld [vmem:[%s1 + $0x1d0] sm:$0xff]
    %v57 = vld [vmem:[%s1 + $0x1e0] sm:$0xff]
    %v58 = vld [vmem:[%s1 + $0x1f0] sm:$0xff]
    %v59 = vld [vmem:[%s1 + $0x200] sm:$0xff]
    %v60 = vld [vmem:[%s1 + $0x210] sm:$0xff]
    %v61 = vld [vmem:[%s1 + $0x220] sm:$0xff]
    %v62 = vld [vmem:[%s1 + $0x230] sm:$0xff]
    %v63 = vld [vmem:[%s1 + $0x240] sm:$0xff]
    %v64 = vld [vmem:[%s1 + $0x250] sm:$0xff]
    %v65 = vld [vmem:[%s1 + $0x260] sm:$0xff]
    %v66 = vld [vmem:[%s1 + $0x270] sm:$0xff]
    %v67 = vld [vmem:[%s1 + $0x280] sm:$0xff]
    %v68 = vld [vmem:[%s1 + $0x290] sm:$0xff]
    %v69 = vld [vmem:[%s2] ss:$0 sm:$0xff]
    %v70 = vld [vmem:[%s2 + $0x1] ss:$0 sm:$0xff]
    %s71 = scalar_lea.vmem %s2, 2
    %v72 = vld [vmem:[%s71] ss:$8 sm:$0x3]
    %v73 = vld [vmem:[%s2 + $0x3] ss:$0 sm:$0xff]
    %v74 = vld [vmem:[%s2 + $0x4] ss:$0 sm:$0xff]
    %v75 = vld [vmem:[%s2 + $0x5] ss:$0 sm:$0xff]
    %s76 = scalar_lea.vmem %s2, 6
    %v77 = vld [vmem:[%s76] ss:$8 sm:$0x3]
    %v78 = vld [vmem:[%s2 + $0x7] ss:$0 sm:$0xff]
    %v79 = vld [vmem:[%s0] sm:$0xff]
    %v80 = vld [vmem:[%s0 + $0x8] sm:$0xff]
    %vm81 = vcmask 392192
    %v82 = vsel %vm81, %v79, 0.0
    %83 = vadd.xlane.f32.xlu0 %v82
    %v84 = vpop.xlane.xlu0 %83
    %v85 = vsel %vm81, %v80, 0.0
    %86 = vadd.xlane.f32.xlu0 %v85
    %v87 = vpop.xlane.xlu0 %86
    %v88 = vrcp.pop 48.0
    %v89 = vmul.f32 %v84, %v88
    %v90 = vmul.f32 %v87, %v88
    %v91 = vmul.f32 %v79, %v79
    %v92 = vmul.f32 %v80, %v80
    %v93 = vsel %vm81, %v91, 0.0
    %94 = vadd.xlane.f32.xlu0 %v93
    %v95 = vpop.xlane.xlu0 %94
    %v96 = vsel %vm81, %v92, 0.0
    %97 = vadd.xlane.f32.xlu0 %v96
    %v98 = vpop.xlane.xlu0 %97
    %v99 = vmul.f32 %v95, %v88
    %v100 = vmul.f32 %v98, %v88
    %v101 = vmul.f32 %v89, %v89
    %v102 = vmul.f32 %v90, %v90
    %v103 = vsub.f32 %v99, %v101
    %v104 = vsub.f32 %v100, %v102
    %v105 = vsub.f32 %v79, %v89
    %v106 = vsub.f32 %v80, %v90
    %v107 = vadd.f32 %v103, 1e-05
    %v108 = vadd.f32 %v104, 1e-05
    %v109 = vrsqrt.pop %v107
    %v110 = vrsqrt.pop %v108
    %v111 = vmul.f32 %v105, %v109
    %v112 = vmul.f32 %v106, %v110
    %v113 = vmul.f32 %v111, %v69
    %v114 = vmul.f32 %v112, %v69
    %v115 = vadd.f32 %v113, %v70
    %v116 = vadd.f32 %v114, %v70
    %v118 = vlaneseq
    %v119 = vshrl.u32 %v118, 7
    %v120 = vsub.s32 0, %v119
    %v121 = vrot.slane %v72, %v120
    %v122 = vlaneseq
    %v123 = vshrl.u32 %v122, 7
    %v124 = vsub.s32 1, %v123
    %v125 = vrot.slane %v72, %v124
    %v129 = vsel %vm81, %v115, 0
    %v132 = vsel %vm81, %v116, 0
    %134 = vmatprep.subr.mxu0 %v16
    %135 = vmatpush1.msra.mxu0 %v15
    %136 = vmatprep.subr.mxu0 %v18
    %137 = vmatpush1.msra.mxu0 %v17
    %138 = vmatprep.subr.mxu0 %v20
    %139 = vmatpush1.msra.mxu0 %v19
    %140 = vmatprep.subr.mxu0 %v22
    %141 = vmatpush1.msra.mxu0 %v21
    %142 = vmatprep.subr.mxu0 %v24
    %143 = vmatpush1.msra.mxu0 %v23
    %144 = vmatprep.subr.mxu0 %v26
    %145 = vmatpush1.msra.mxu0 %v25
    %146 = vmatprep.subr.mxu0 0.0
    %147 = vmatpush1.msra.mxu0 0.0
    %148 = vmatprep.subr.mxu0 0.0
    %149 = vmatpush1.msra.mxu0 0.0
    %150 = vmatprep.subr.mxu0 0.0
    %151 = vmatpush1.msra.mxu0 0.0
    %152 = vmatprep.subr.mxu0 0.0
    %153 = vmatpush1.msra.mxu0 0.0
    %154 = vmatprep.subr.mxu0 0.0
    %155 = vmatpush1.msra.mxu0 0.0
    %156 = vmatprep.subr.mxu0 0.0
    %157 = vmatpush1.msra.mxu0 0.0
    %158 = vmatprep.subr.mxu0 0.0
    %159 = vmatpush1.msra.mxu0 0.0
    %160 = vmatprep.subr.mxu0 0.0
    %161 = vmatpush1.msra.mxu0 0.0
    %162 = vmatprep.subr.mxu0 0.0
    %163 = vmatpush1.msra.mxu0 0.0
    %164 = vmatprep.subr.mxu0 0.0
    %165 = vmatpush1.msra.mxu0 0.0
    %166 = vmatprep.subr.mxu0 0.0
    %167 = vmatpush1.msra.mxu0 0.0
    %168 = vmatprep.subr.mxu0 0.0
    %169 = vmatpush1.msra.mxu0 0.0
    %170 = vmatprep.subr.mxu0 0.0
    %171 = vmatpush1.msra.mxu0 0.0
    %172 = vmatprep.subr.mxu0 0.0
    %173 = vmatpush1.msra.mxu0 0.0
    %174 = vmatprep.subr.mxu0 0.0
    %175 = vmatpush1.msra.mxu0 0.0
    %176 = vmatprep.subr.mxu0 0.0
    %177 = vmatpush1.msra.mxu0 0.0
    %178 = vmatprep.subr.mxu0 0.0
    %179 = vmatpush1.msra.mxu0 0.0
    %180 = vmatprep.subr.mxu0 0.0
    %181 = vmatpush1.msra.mxu0 0.0
    %182 = vmatprep.subr.mxu0 0.0
    %183 = vmatpush1.msra.mxu0 0.0
    %184 = vmatprep.subr.mxu0 0.0
    %185 = vmatpush1.msra.mxu0 0.0
    %186 = vmatprep.subr.mxu0 0.0
    %187 = vmatpush1.msra.mxu0 0.0
    %188 = vmatprep.subr.mxu0 0.0
    %189 = vmatpush1.msra.mxu0 0.0
    %190 = vmatprep.subr.mxu0 0.0
    %191 = vmatpush1.msra.mxu0 0.0
    %192 = vmatprep.subr.mxu0 0.0
    %193 = vmatpush1.msra.mxu0 0.0
    %194 = vmatprep.subr.mxu0 0.0
    %195 = vmatpush1.msra.mxu0 0.0
    %196 = vmatprep.subr.mxu0 0.0
    %197 = vmatpush1.msra.mxu0 0.0
    %198 = vmatprep.mubr.f32.mxu0 0.0
    %199 = vmatmul.mubr.f32.gmra.mrb[0].mxu0 %v129
    %v200 = vpop.f32.mrb[0].mxu0
    %v201 = vadd.f32 %v121, %v200
    %v202 = vpop.f32.mrb[0].mxu0
    %v203 = vadd.f32 %v125, %v202
    %204 = vmatprep.mubr.f32.mxu0 0.0
    %205 = vmatmul.mubr.f32.gmra.mrb[0].mxu0 %v132
    %v206 = vpop.f32.mrb[0].mxu0
    %v207 = vadd.f32 %v121, %v206
    %v208 = vpop.f32.mrb[0].mxu0
    %v209 = vadd.f32 %v125, %v208
    %210 = vdwg.mxu0
    %212 = vrot.lane.b32.xlu0 %v201, 112
    %v213 = vpop.permute.xlu0 %212
    %215 = vrot.lane.b32.xlu0 %v207, 112
    %v216 = vpop.permute.xlu0 %215
    %217 = vrot.lane.b32.xlu0 %v201, 96
    %v218 = vpop.permute.xlu0 %217
    %219 = vrot.lane.b32.xlu0 %v207, 96
    %v220 = vpop.permute.xlu0 %219
    %222 = vrot.lane.b32.xlu0 %v203, 96
    %v223 = vpop.permute.xlu0 %222
    %225 = vrot.lane.b32.xlu0 %v209, 96
    %v226 = vpop.permute.xlu0 %225
    %227 = vrot.lane.b32.xlu0 %v201, 80
    %v228 = vpop.permute.xlu0 %227
    %vm229 = vcmask 130048
    %v230 = vsel %vm229, %v201, 0
    %v232 = vsel %vm229, %v228, 0
    %234 = vmatprep.subr.mxu0 0.0
    %235 = vmatpush1.xpose.msra.mxu0 %v232
    %236 = vmatprep.subr.mxu0 0.0
    %237 = vmatpush1.xpose.msra.mxu0 0.0
    %238 = vmatprep.subr.mxu0 0.0
    %239 = vmatpush1.xpose.msra.mxu0 0.0
    %240 = vmatprep.subr.mxu0 0.0
    %241 = vmatpush1.xpose.msra.mxu0 0.0
    %242 = vmatprep.subr.mxu0 0.0
    %243 = vmatpush1.xpose.msra.mxu0 0.0
    %244 = vmatprep.subr.mxu0 0.0
    %245 = vmatpush1.xpose.msra.mxu0 0.0
    %246 = vmatprep.subr.mxu0 0.0
    %247 = vmatpush1.xpose.msra.mxu0 0.0
    %248 = vmatprep.subr.mxu0 0.0
    %249 = vmatpush1.xpose.msra.mxu0 0.0
    %250 = vmatprep.subr.mxu0 0.0
    %251 = vmatpush1.xpose.msra.mxu0 0.0
    %252 = vmatprep.subr.mxu0 0.0
    %253 = vmatpush1.xpose.msra.mxu0 0.0
    %254 = vmatprep.subr.mxu0 0.0
    %255 = vmatpush1.xpose.msra.mxu0 0.0
    %256 = vmatprep.subr.mxu0 0.0
    %257 = vmatpush1.xpose.msra.mxu0 0.0
    %258 = vmatprep.subr.mxu0 0.0
    %259 = vmatpush1.xpose.msra.mxu0 0.0
    %260 = vmatprep.subr.mxu0 0.0
    %261 = vmatpush1.xpose.msra.mxu0 0.0
    %262 = vmatprep.subr.mxu0 0.0
    %263 = vmatpush1.xpose.msra.mxu0 0.0
    %264 = vmatprep.subr.mxu0 0.0
    %265 = vmatpush1.xpose.msra.mxu0 0.0
    %266 = vmatprep.subr.mxu0 0.0
    %267 = vmatpush1.xpose.msra.mxu0 0.0
    %268 = vmatprep.subr.mxu0 0.0
    %269 = vmatpush1.xpose.msra.mxu0 0.0
    %270 = vmatprep.subr.mxu0 0.0
    %271 = vmatpush1.xpose.msra.mxu0 0.0
    %272 = vmatprep.subr.mxu0 0.0
    %273 = vmatpush1.xpose.msra.mxu0 0.0
    %274 = vmatprep.subr.mxu0 0.0
    %275 = vmatpush1.xpose.msra.mxu0 0.0
    %276 = vmatprep.subr.mxu0 0.0
    %277 = vmatpush1.xpose.msra.mxu0 0.0
    %278 = vmatprep.subr.mxu0 0.0
    %279 = vmatpush1.xpose.msra.mxu0 0.0
    %280 = vmatprep.subr.mxu0 0.0
    %281 = vmatpush1.xpose.msra.mxu0 0.0
    %282 = vmatprep.subr.mxu0 0.0
    %283 = vmatpush1.xpose.msra.mxu0 0.0
    %284 = vmatprep.subr.mxu0 0.0
    %285 = vmatpush1.xpose.msra.mxu0 0.0
    %286 = vmatprep.subr.mxu0 0.0
    %287 = vmatpush1.xpose.msra.mxu0 0.0
    %288 = vmatprep.subr.mxu0 0.0
    %289 = vmatpush1.xpose.msra.mxu0 0.0
    %290 = vmatprep.subr.mxu0 0.0
    %291 = vmatpush1.xpose.msra.mxu0 0.0
    %292 = vmatprep.subr.mxu0 0.0
    %293 = vmatpush1.xpose.msra.mxu0 0.0
    %294 = vmatprep.subr.mxu0 0.0
    %295 = vmatpush1.xpose.msra.mxu0 0.0
    %296 = vmatprep.subr.mxu0 0.0
    %297 = vmatpush1.xpose.msra.mxu0 0.0
    %298 = vmatprep.mubr.f32.mxu0 0.0
    %299 = vmatmul.mubr.f32.gmra.mrb[0].mxu0 %v230
    %v300 = vpop.f32.mrb[0].mxu0
    %v301 = vadd.f32 0.0, %v300
    %v302 = vpop.f32.mrb[0].mxu0
    %303 = vdwg.mxu0
    %304 = vrot.lane.b32.xlu0 %v207, 80
    %v305 = vpop.permute.xlu0 %304
    %v306 = vsel %vm229, %v207, 0
    %v308 = vsel %vm229, %v305, 0
    %310 = vmatprep.subr.mxu0 0.0
    %311 = vmatpush1.xpose.msra.mxu0 %v308
    %312 = vmatprep.subr.mxu0 0.0
    %313 = vmatpush1.xpose.msra.mxu0 0.0
    %314 = vmatprep.subr.mxu0 0.0
    %315 = vmatpush1.xpose.msra.mxu0 0.0
    %316 = vmatprep.subr.mxu0 0.0
    %317 = vmatpush1.xpose.msra.mxu0 0.0
    %318 = vmatprep.subr.mxu0 0.0
    %319 = vmatpush1.xpose.msra.mxu0 0.0
    %320 = vmatprep.subr.mxu0 0.0
    %321 = vmatpush1.xpose.msra.mxu0 0.0
    %322 = vmatprep.subr.mxu0 0.0
    %323 = vmatpush1.xpose.msra.mxu0 0.0
    %324 = vmatprep.subr.mxu0 0.0
    %325 = vmatpush1.xpose.msra.mxu0 0.0
    %326 = vmatprep.subr.mxu0 0.0
    %327 = vmatpush1.xpose.msra.mxu0 0.0
    %328 = vmatprep.subr.mxu0 0.0
    %329 = vmatpush1.xpose.msra.mxu0 0.0
    %330 = vmatprep.subr.mxu0 0.0
    %331 = vmatpush1.xpose.msra.mxu0 0.0
    %332 = vmatprep.subr.mxu0 0.0
    %333 = vmatpush1.xpose.msra.mxu0 0.0
    %334 = vmatprep.subr.mxu0 0.0
    %335 = vmatpush1.xpose.msra.mxu0 0.0
    %336 = vmatprep.subr.mxu0 0.0
    %337 = vmatpush1.xpose.msra.mxu0 0.0
    %338 = vmatprep.subr.mxu0 0.0
    %339 = vmatpush1.xpose.msra.mxu0 0.0
    %340 = vmatprep.subr.mxu0 0.0
    %341 = vmatpush1.xpose.msra.mxu0 0.0
    %342 = vmatprep.subr.mxu0 0.0
    %343 = vmatpush1.xpose.msra.mxu0 0.0
    %344 = vmatprep.subr.mxu0 0.0
    %345 = vmatpush1.xpose.msra.mxu0 0.0
    %346 = vmatprep.subr.mxu0 0.0
    %347 = vmatpush1.xpose.msra.mxu0 0.0
    %348 = vmatprep.subr.mxu0 0.0
    %349 = vmatpush1.xpose.msra.mxu0 0.0
    %350 = vmatprep.subr.mxu0 0.0
    %351 = vmatpush1.xpose.msra.mxu0 0.0
    %352 = vmatprep.subr.mxu0 0.0
    %353 = vmatpush1.xpose.msra.mxu0 0.0
    %354 = vmatprep.subr.mxu0 0.0
    %355 = vmatpush1.xpose.msra.mxu0 0.0
    %356 = vmatprep.subr.mxu0 0.0
    %357 = vmatpush1.xpose.msra.mxu0 0.0
    %358 = vmatprep.subr.mxu0 0.0
    %359 = vmatpush1.xpose.msra.mxu0 0.0
    %360 = vmatprep.subr.mxu0 0.0
    %361 = vmatpush1.xpose.msra.mxu0 0.0
    %362 = vmatprep.subr.mxu0 0.0
    %363 = vmatpush1.xpose.msra.mxu0 0.0
    %364 = vmatprep.subr.mxu0 0.0
    %365 = vmatpush1.xpose.msra.mxu0 0.0
    %366 = vmatprep.subr.mxu0 0.0
    %367 = vmatpush1.xpose.msra.mxu0 0.0
    %368 = vmatprep.subr.mxu0 0.0
    %369 = vmatpush1.xpose.msra.mxu0 0.0
    %370 = vmatprep.subr.mxu0 0.0
    %371 = vmatpush1.xpose.msra.mxu0 0.0
    %372 = vmatprep.subr.mxu0 0.0
    %373 = vmatpush1.xpose.msra.mxu0 0.0
    %374 = vmatprep.mubr.f32.mxu0 0.0
    %375 = vmatmul.mubr.f32.gmra.mrb[0].mxu0 %v306
    %v376 = vpop.f32.mrb[0].mxu0
    %v377 = vadd.f32 0.0, %v376
    %v378 = vpop.f32.mrb[0].mxu0
    %379 = vdwg.mxu0
    %380 = vrot.lane.b32.xlu0 %v213, 80
    %v381 = vpop.permute.xlu0 %380
    %v382 = vsel %vm229, %v213, 0
    %v384 = vsel %vm229, %v381, 0
    %386 = vmatprep.subr.mxu0 0.0
    %387 = vmatpush1.xpose.msra.mxu0 %v384
    %388 = vmatprep.subr.mxu0 0.0
    %389 = vmatpush1.xpose.msra.mxu0 0.0
    %390 = vmatprep.subr.mxu0 0.0
    %391 = vmatpush1.xpose.msra.mxu0 0.0
    %392 = vmatprep.subr.mxu0 0.0
    %393 = vmatpush1.xpose.msra.mxu0 0.0
    %394 = vmatprep.subr.mxu0 0.0
    %395 = vmatpush1.xpose.msra.mxu0 0.0
    %396 = vmatprep.subr.mxu0 0.0
    %397 = vmatpush1.xpose.msra.mxu0 0.0
    %398 = vmatprep.subr.mxu0 0.0
    %399 = vmatpush1.xpose.msra.mxu0 0.0
    %400 = vmatprep.subr.mxu0 0.0
    %401 = vmatpush1.xpose.msra.mxu0 0.0
    %402 = vmatprep.subr.mxu0 0.0
    %403 = vmatpush1.xpose.msra.mxu0 0.0
    %404 = vmatprep.subr.mxu0 0.0
    %405 = vmatpush1.xpose.msra.mxu0 0.0
    %406 = vmatprep.subr.mxu0 0.0
    %407 = vmatpush1.xpose.msra.mxu0 0.0
    %408 = vmatprep.subr.mxu0 0.0
    %409 = vmatpush1.xpose.msra.mxu0 0.0
    %410 = vmatprep.subr.mxu0 0.0
    %411 = vmatpush1.xpose.msra.mxu0 0.0
    %412 = vmatprep.subr.mxu0 0.0
    %413 = vmatpush1.xpose.msra.mxu0 0.0
    %414 = vmatprep.subr.mxu0 0.0
    %415 = vmatpush1.xpose.msra.mxu0 0.0
    %416 = vmatprep.subr.mxu0 0.0
    %417 = vmatpush1.xpose.msra.mxu0 0.0
    %418 = vmatprep.subr.mxu0 0.0
    %419 = vmatpush1.xpose.msra.mxu0 0.0
    %420 = vmatprep.subr.mxu0 0.0
    %421 = vmatpush1.xpose.msra.mxu0 0.0
    %422 = vmatprep.subr.mxu0 0.0
    %423 = vmatpush1.xpose.msra.mxu0 0.0
    %424 = vmatprep.subr.mxu0 0.0
    %425 = vmatpush1.xpose.msra.mxu0 0.0
    %426 = vmatprep.subr.mxu0 0.0
    %427 = vmatpush1.xpose.msra.mxu0 0.0
    %428 = vmatprep.subr.mxu0 0.0
    %429 = vmatpush1.xpose.msra.mxu0 0.0
    %430 = vmatprep.subr.mxu0 0.0
    %431 = vmatpush1.xpose.msra.mxu0 0.0
    %432 = vmatprep.subr.mxu0 0.0
    %433 = vmatpush1.xpose.msra.mxu0 0.0
    %434 = vmatprep.subr.mxu0 0.0
    %435 = vmatpush1.xpose.msra.mxu0 0.0
    %436 = vmatprep.subr.mxu0 0.0
    %437 = vmatpush1.xpose.msra.mxu0 0.0
    %438 = vmatprep.subr.mxu0 0.0
    %439 = vmatpush1.xpose.msra.mxu0 0.0
    %440 = vmatprep.subr.mxu0 0.0
    %441 = vmatpush1.xpose.msra.mxu0 0.0
    %442 = vmatprep.subr.mxu0 0.0
    %443 = vmatpush1.xpose.msra.mxu0 0.0
    %444 = vmatprep.subr.mxu0 0.0
    %445 = vmatpush1.xpose.msra.mxu0 0.0
    %446 = vmatprep.subr.mxu0 0.0
    %447 = vmatpush1.xpose.msra.mxu0 0.0
    %448 = vmatprep.subr.mxu0 0.0
    %449 = vmatpush1.xpose.msra.mxu0 0.0
    %450 = vmatprep.mubr.f32.mxu0 0.0
    %451 = vmatmul.mubr.f32.gmra.mrb[0].mxu0 %v382
    %v452 = vpop.f32.mrb[0].mxu0
    %v453 = vadd.f32 0.0, %v452
    %v454 = vpop.f32.mrb[0].mxu0
    %455 = vdwg.mxu0
    %456 = vrot.lane.b32.xlu0 %v216, 80
    %v457 = vpop.permute.xlu0 %456
    %v458 = vsel %vm229, %v216, 0
    %v460 = vsel %vm229, %v457, 0
    %462 = vmatprep.subr.mxu0 0.0
    %463 = vmatpush1.xpose.msra.mxu0 %v460
    %464 = vmatprep.subr.mxu0 0.0
    %465 = vmatpush1.xpose.msra.mxu0 0.0
    %466 = vmatprep.subr.mxu0 0.0
    %467 = vmatpush1.xpose.msra.mxu0 0.0
    %468 = vmatprep.subr.mxu0 0.0
    %469 = vmatpush1.xpose.msra.mxu0 0.0
    %470 = vmatprep.subr.mxu0 0.0
    %471 = vmatpush1.xpose.msra.mxu0 0.0
    %472 = vmatprep.subr.mxu0 0.0
    %473 = vmatpush1.xpose.msra.mxu0 0.0
    %474 = vmatprep.subr.mxu0 0.0
    %475 = vmatpush1.xpose.msra.mxu0 0.0
    %476 = vmatprep.subr.mxu0 0.0
    %477 = vmatpush1.xpose.msra.mxu0 0.0
    %478 = vmatprep.subr.mxu0 0.0
    %479 = vmatpush1.xpose.msra.mxu0 0.0
    %480 = vmatprep.subr.mxu0 0.0
    %481 = vmatpush1.xpose.msra.mxu0 0.0
    %482 = vmatprep.subr.mxu0 0.0
    %483 = vmatpush1.xpose.msra.mxu0 0.0
    %484 = vmatprep.subr.mxu0 0.0
    %485 = vmatpush1.xpose.msra.mxu0 0.0
    %486 = vmatprep.subr.mxu0 0.0
    %487 = vmatpush1.xpose.msra.mxu0 0.0
    %488 = vmatprep.subr.mxu0 0.0
    %489 = vmatpush1.xpose.msra.mxu0 0.0
    %490 = vmatprep.subr.mxu0 0.0
    %491 = vmatpush1.xpose.msra.mxu0 0.0
    %492 = vmatprep.subr.mxu0 0.0
    %493 = vmatpush1.xpose.msra.mxu0 0.0
    %494 = vmatprep.subr.mxu0 0.0
    %495 = vmatpush1.xpose.msra.mxu0 0.0
    %496 = vmatprep.subr.mxu0 0.0
    %497 = vmatpush1.xpose.msra.mxu0 0.0
    %498 = vmatprep.subr.mxu0 0.0
    %499 = vmatpush1.xpose.msra.mxu0 0.0
    %500 = vmatprep.subr.mxu0 0.0
    %501 = vmatpush1.xpose.msra.mxu0 0.0
    %502 = vmatprep.subr.mxu0 0.0
    %503 = vmatpush1.xpose.msra.mxu0 0.0
    %504 = vmatprep.subr.mxu0 0.0
    %505 = vmatpush1.xpose.msra.mxu0 0.0
    %506 = vmatprep.subr.mxu0 0.0
    %507 = vmatpush1.xpose.msra.mxu0 0.0
    %508 = vmatprep.subr.mxu0 0.0
    %509 = vmatpush1.xpose.msra.mxu0 0.0
    %510 = vmatprep.subr.mxu0 0.0
    %511 = vmatpush1.xpose.msra.mxu0 0.0
    %512 = vmatprep.subr.mxu0 0.0
    %513 = vmatpush1.xpose.msra.mxu0 0.0
    %514 = vmatprep.subr.mxu0 0.0
    %515 = vmatpush1.xpose.msra.mxu0 0.0
    %516 = vmatprep.subr.mxu0 0.0
    %517 = vmatpush1.xpose.msra.mxu0 0.0
    %518 = vmatprep.subr.mxu0 0.0
    %519 = vmatpush1.xpose.msra.mxu0 0.0
    %520 = vmatprep.subr.mxu0 0.0
    %521 = vmatpush1.xpose.msra.mxu0 0.0
    %522 = vmatprep.subr.mxu0 0.0
    %523 = vmatpush1.xpose.msra.mxu0 0.0
    %524 = vmatprep.subr.mxu0 0.0
    %525 = vmatpush1.xpose.msra.mxu0 0.0
    %526 = vmatprep.mubr.f32.mxu0 0.0
    %527 = vmatmul.mubr.f32.gmra.mrb[0].mxu0 %v458
    %v528 = vpop.f32.mrb[0].mxu0
    %v529 = vadd.f32 0.0, %v528
    %v530 = vpop.f32.mrb[0].mxu0
    %531 = vdwg.mxu0
    %532 = vrot.lane.b32.xlu0 %v218, 80
    %v533 = vpop.permute.xlu0 %532
    %v534 = vsel %vm229, %v218, 0
    %v536 = vsel %vm229, %v533, 0
    %538 = vmatprep.subr.mxu0 0.0
    %539 = vmatpush1.xpose.msra.mxu0 %v536
    %540 = vmatprep.subr.mxu0 0.0
    %541 = vmatpush1.xpose.msra.mxu0 0.0
    %542 = vmatprep.subr.mxu0 0.0
    %543 = vmatpush1.xpose.msra.mxu0 0.0
    %544 = vmatprep.subr.mxu0 0.0
    %545 = vmatpush1.xpose.msra.mxu0 0.0
    %546 = vmatprep.subr.mxu0 0.0
    %547 = vmatpush1.xpose.msra.mxu0 0.0
    %548 = vmatprep.subr.mxu0 0.0
    %549 = vmatpush1.xpose.msra.mxu0 0.0
    %550 = vmatprep.subr.mxu0 0.0
    %551 = vmatpush1.xpose.msra.mxu0 0.0
    %552 = vmatprep.subr.mxu0 0.0
    %553 = vmatpush1.xpose.msra.mxu0 0.0
    %554 = vmatprep.subr.mxu0 0.0
    %555 = vmatpush1.xpose.msra.mxu0 0.0
    %556 = vmatprep.subr.mxu0 0.0
    %557 = vmatpush1.xpose.msra.mxu0 0.0
    %558 = vmatprep.subr.mxu0 0.0
    %559 = vmatpush1.xpose.msra.mxu0 0.0
    %560 = vmatprep.subr.mxu0 0.0
    %561 = vmatpush1.xpose.msra.mxu0 0.0
    %562 = vmatprep.subr.mxu0 0.0
    %563 = vmatpush1.xpose.msra.mxu0 0.0
    %564 = vmatprep.subr.mxu0 0.0
    %565 = vmatpush1.xpose.msra.mxu0 0.0
    %566 = vmatprep.subr.mxu0 0.0
    %567 = vmatpush1.xpose.msra.mxu0 0.0
    %568 = vmatprep.subr.mxu0 0.0
    %569 = vmatpush1.xpose.msra.mxu0 0.0
    %570 = vmatprep.subr.mxu0 0.0
    %571 = vmatpush1.xpose.msra.mxu0 0.0
    %572 = vmatprep.subr.mxu0 0.0
    %573 = vmatpush1.xpose.msra.mxu0 0.0
    %574 = vmatprep.subr.mxu0 0.0
    %575 = vmatpush1.xpose.msra.mxu0 0.0
    %576 = vmatprep.subr.mxu0 0.0
    %577 = vmatpush1.xpose.msra.mxu0 0.0
    %578 = vmatprep.subr.mxu0 0.0
    %579 = vmatpush1.xpose.msra.mxu0 0.0
    %580 = vmatprep.subr.mxu0 0.0
    %581 = vmatpush1.xpose.msra.mxu0 0.0
    %582 = vmatprep.subr.mxu0 0.0
    %583 = vmatpush1.xpose.msra.mxu0 0.0
    %584 = vmatprep.subr.mxu0 0.0
    %585 = vmatpush1.xpose.msra.mxu0 0.0
    %586 = vmatprep.subr.mxu0 0.0
    %587 = vmatpush1.xpose.msra.mxu0 0.0
    %588 = vmatprep.subr.mxu0 0.0
    %589 = vmatpush1.xpose.msra.mxu0 0.0
    %590 = vmatprep.subr.mxu0 0.0
    %591 = vmatpush1.xpose.msra.mxu0 0.0
    %592 = vmatprep.subr.mxu0 0.0
    %593 = vmatpush1.xpose.msra.mxu0 0.0
    %594 = vmatprep.subr.mxu0 0.0
    %595 = vmatpush1.xpose.msra.mxu0 0.0
    %596 = vmatprep.subr.mxu0 0.0
    %597 = vmatpush1.xpose.msra.mxu0 0.0
    %598 = vmatprep.subr.mxu0 0.0
    %599 = vmatpush1.xpose.msra.mxu0 0.0
    %600 = vmatprep.subr.mxu0 0.0
    %601 = vmatpush1.xpose.msra.mxu0 0.0
    %602 = vmatprep.mubr.f32.mxu0 0.0
    %603 = vmatmul.mubr.f32.gmra.mrb[0].mxu0 %v534
    %v604 = vpop.f32.mrb[0].mxu0
    %v605 = vadd.f32 0.0, %v604
    %v606 = vpop.f32.mrb[0].mxu0
    %607 = vdwg.mxu0
    %608 = vrot.lane.b32.xlu0 %v220, 80
    %v609 = vpop.permute.xlu0 %608
    %v610 = vsel %vm229, %v220, 0
    %v612 = vsel %vm229, %v609, 0
    %614 = vmatprep.subr.mxu0 0.0
    %615 = vmatpush1.xpose.msra.mxu0 %v612
    %616 = vmatprep.subr.mxu0 0.0
    %617 = vmatpush1.xpose.msra.mxu0 0.0
    %618 = vmatprep.subr.mxu0 0.0
    %619 = vmatpush1.xpose.msra.mxu0 0.0
    %620 = vmatprep.subr.mxu0 0.0
    %621 = vmatpush1.xpose.msra.mxu0 0.0
    %622 = vmatprep.subr.mxu0 0.0
    %623 = vmatpush1.xpose.msra.mxu0 0.0
    %624 = vmatprep.subr.mxu0 0.0
    %625 = vmatpush1.xpose.msra.mxu0 0.0
    %626 = vmatprep.subr.mxu0 0.0
    %627 = vmatpush1.xpose.msra.mxu0 0.0
    %628 = vmatprep.subr.mxu0 0.0
    %629 = vmatpush1.xpose.msra.mxu0 0.0
    %630 = vmatprep.subr.mxu0 0.0
    %631 = vmatpush1.xpose.msra.mxu0 0.0
    %632 = vmatprep.subr.mxu0 0.0
    %633 = vmatpush1.xpose.msra.mxu0 0.0
    %634 = vmatprep.subr.mxu0 0.0
    %635 = vmatpush1.xpose.msra.mxu0 0.0
    %636 = vmatprep.subr.mxu0 0.0
    %637 = vmatpush1.xpose.msra.mxu0 0.0
    %638 = vmatprep.subr.mxu0 0.0
    %639 = vmatpush1.xpose.msra.mxu0 0.0
    %640 = vmatprep.subr.mxu0 0.0
    %641 = vmatpush1.xpose.msra.mxu0 0.0
    %642 = vmatprep.subr.mxu0 0.0
    %643 = vmatpush1.xpose.msra.mxu0 0.0
    %644 = vmatprep.subr.mxu0 0.0
    %645 = vmatpush1.xpose.msra.mxu0 0.0
    %646 = vmatprep.subr.mxu0 0.0
    %647 = vmatpush1.xpose.msra.mxu0 0.0
    %648 = vmatprep.subr.mxu0 0.0
    %649 = vmatpush1.xpose.msra.mxu0 0.0
    %650 = vmatprep.subr.mxu0 0.0
    %651 = vmatpush1.xpose.msra.mxu0 0.0
    %652 = vmatprep.subr.mxu0 0.0
    %653 = vmatpush1.xpose.msra.mxu0 0.0
    %654 = vmatprep.subr.mxu0 0.0
    %655 = vmatpush1.xpose.msra.mxu0 0.0
    %656 = vmatprep.subr.mxu0 0.0
    %657 = vmatpush1.xpose.msra.mxu0 0.0
    %658 = vmatprep.subr.mxu0 0.0
    %659 = vmatpush1.xpose.msra.mxu0 0.0
    %660 = vmatprep.subr.mxu0 0.0
    %661 = vmatpush1.xpose.msra.mxu0 0.0
    %662 = vmatprep.subr.mxu0 0.0
    %663 = vmatpush1.xpose.msra.mxu0 0.0
    %664 = vmatprep.subr.mxu0 0.0
    %665 = vmatpush1.xpose.msra.mxu0 0.0
    %666 = vmatprep.subr.mxu0 0.0
    %667 = vmatpush1.xpose.msra.mxu0 0.0
    %668 = vmatprep.subr.mxu0 0.0
    %669 = vmatpush1.xpose.msra.mxu0 0.0
    %670 = vmatprep.subr.mxu0 0.0
    %671 = vmatpush1.xpose.msra.mxu0 0.0
    %672 = vmatprep.subr.mxu0 0.0
    %673 = vmatpush1.xpose.msra.mxu0 0.0
    %674 = vmatprep.subr.mxu0 0.0
    %675 = vmatpush1.xpose.msra.mxu0 0.0
    %676 = vmatprep.subr.mxu0 0.0
    %677 = vmatpush1.xpose.msra.mxu0 0.0
    %678 = vmatprep.mubr.f32.mxu0 0.0
    %679 = vmatmul.mubr.f32.gmra.mrb[0].mxu0 %v610
    %v680 = vpop.f32.mrb[0].mxu0
    %v681 = vadd.f32 0.0, %v680
    %v682 = vpop.f32.mrb[0].mxu0
    %683 = vdwg.mxu0
    %vm684 = vcmask 64512
    %v685 = vsel %vm684, %v301, -inf
    %686 = vmax.xlane.f32.xlu0 %v685
    %v687 = vpop.xlane.xlu0 %686
    %v688 = vsel %vm684, %v377, -inf
    %689 = vmax.xlane.f32.xlu0 %v688
    %v690 = vpop.xlane.xlu0 %689
    %v691 = vsel %vm684, %v453, -inf
    %692 = vmax.xlane.f32.xlu0 %v691
    %v693 = vpop.xlane.xlu0 %692
    %v694 = vsel %vm684, %v529, -inf
    %695 = vmax.xlane.f32.xlu0 %v694
    %v696 = vpop.xlane.xlu0 %695
    %v697 = vsel %vm684, %v605, -inf
    %698 = vmax.xlane.f32.xlu0 %v697
    %v699 = vpop.xlane.xlu0 %698
    %v700 = vsel %vm684, %v681, -inf
    %701 = vmax.xlane.f32.xlu0 %v700
    %v702 = vpop.xlane.xlu0 %701
    %v703 = vsub.f32 %v301, %v687
    %v704 = vsub.f32 %v377, %v690
    %v705 = vsub.f32 %v453, %v693
    %v706 = vsub.f32 %v529, %v696
    %v707 = vsub.f32 %v605, %v699
    %v708 = vsub.f32 %v681, %v702
    %v709 = vmul.f32 %v703, 1.442695
    %v710 = vpow.pop %v709
    %v711 = vmul.f32 %v704, 1.442695
    %v712 = vpow.pop %v711
    %v713 = vmul.f32 %v705, 1.442695
    %v714 = vpow.pop %v713
    %v715 = vmul.f32 %v706, 1.442695
    %v716 = vpow.pop %v715
    %v717 = vmul.f32 %v707, 1.442695
    %v718 = vpow.pop %v717
    %v719 = vmul.f32 %v708, 1.442695
    %v720 = vpow.pop %v719
    %v721 = vsel %vm684, %v710, 0.0
    %722 = vadd.xlane.f32.xlu0 %v721
    %v723 = vpop.xlane.xlu0 %722
    %v724 = vsel %vm684, %v712, 0.0
    %725 = vadd.xlane.f32.xlu0 %v724
    %v726 = vpop.xlane.xlu0 %725
    %v727 = vsel %vm684, %v714, 0.0
    %728 = vadd.xlane.f32.xlu0 %v727
    %v729 = vpop.xlane.xlu0 %728
    %v730 = vsel %vm684, %v716, 0.0
    %731 = vadd.xlane.f32.xlu0 %v730
    %v732 = vpop.xlane.xlu0 %731
    %v733 = vsel %vm684, %v718, 0.0
    %734 = vadd.xlane.f32.xlu0 %v733
    %v735 = vpop.xlane.xlu0 %734
    %v736 = vsel %vm684, %v720, 0.0
    %737 = vadd.xlane.f32.xlu0 %v736
    %v738 = vpop.xlane.xlu0 %737
    %v739 = vrcp.pop %v723
    %v740 = vrcp.pop %v726
    %v741 = vrcp.pop %v729
    %v742 = vrcp.pop %v732
    %v743 = vrcp.pop %v735
    %v744 = vrcp.pop %v738
    %v745 = vmul.f32 %v710, %v739
    %v746 = vmul.f32 %v712, %v740
    %v747 = vmul.f32 %v714, %v741
    %v748 = vmul.f32 %v716, %v742
    %v749 = vmul.f32 %v718, %v743
    %v750 = vmul.f32 %v720, %v744
    %751 = vrot.lane.b32.xlu0 %v201, 32
    %v752 = vpop.permute.xlu0 %751
    %v755 = vsel %vm684, %v745, 0
    %757 = vmatprep.subr.mxu0 0.0
    %758 = vmatpush1.msra.mxu0 %v752
    %759 = vmatprep.subr.mxu0 0.0
    %760 = vmatpush1.msra.mxu0 0.0
    %761 = vmatprep.subr.mxu0 0.0
    %762 = vmatpush1.msra.mxu0 0.0
    %763 = vmatprep.subr.mxu0 0.0
    %764 = vmatpush1.msra.mxu0 0.0
    %765 = vmatprep.subr.mxu0 0.0
    %766 = vmatpush1.msra.mxu0 0.0
    %767 = vmatprep.subr.mxu0 0.0
    %768 = vmatpush1.msra.mxu0 0.0
    %769 = vmatprep.subr.mxu0 0.0
    %770 = vmatpush1.msra.mxu0 0.0
    %771 = vmatprep.subr.mxu0 0.0
    %772 = vmatpush1.msra.mxu0 0.0
    %773 = vmatprep.subr.mxu0 0.0
    %774 = vmatpush1.msra.mxu0 0.0
    %775 = vmatprep.subr.mxu0 0.0
    %776 = vmatpush1.msra.mxu0 0.0
    %777 = vmatprep.subr.mxu0 0.0
    %778 = vmatpush1.msra.mxu0 0.0
    %779 = vmatprep.subr.mxu0 0.0
    %780 = vmatpush1.msra.mxu0 0.0
    %781 = vmatprep.subr.mxu0 0.0
    %782 = vmatpush1.msra.mxu0 0.0
    %783 = vmatprep.subr.mxu0 0.0
    %784 = vmatpush1.msra.mxu0 0.0
    %785 = vmatprep.subr.mxu0 0.0
    %786 = vmatpush1.msra.mxu0 0.0
    %787 = vmatprep.subr.mxu0 0.0
    %788 = vmatpush1.msra.mxu0 0.0
    %789 = vmatprep.subr.mxu0 0.0
    %790 = vmatpush1.msra.mxu0 0.0
    %791 = vmatprep.subr.mxu0 0.0
    %792 = vmatpush1.msra.mxu0 0.0
    %793 = vmatprep.subr.mxu0 0.0
    %794 = vmatpush1.msra.mxu0 0.0
    %795 = vmatprep.subr.mxu0 0.0
    %796 = vmatpush1.msra.mxu0 0.0
    %797 = vmatprep.subr.mxu0 0.0
    %798 = vmatpush1.msra.mxu0 0.0
    %799 = vmatprep.subr.mxu0 0.0
    %800 = vmatpush1.msra.mxu0 0.0
    %801 = vmatprep.subr.mxu0 0.0
    %802 = vmatpush1.msra.mxu0 0.0
    %803 = vmatprep.subr.mxu0 0.0
    %804 = vmatpush1.msra.mxu0 0.0
    %805 = vmatprep.subr.mxu0 0.0
    %806 = vmatpush1.msra.mxu0 0.0
    %807 = vmatprep.subr.mxu0 0.0
    %808 = vmatpush1.msra.mxu0 0.0
    %809 = vmatprep.subr.mxu0 0.0
    %810 = vmatpush1.msra.mxu0 0.0
    %811 = vmatprep.subr.mxu0 0.0
    %812 = vmatpush1.msra.mxu0 0.0
    %813 = vmatprep.subr.mxu0 0.0
    %814 = vmatpush1.msra.mxu0 0.0
    %815 = vmatprep.subr.mxu0 0.0
    %816 = vmatpush1.msra.mxu0 0.0
    %817 = vmatprep.subr.mxu0 0.0
    %818 = vmatpush1.msra.mxu0 0.0
    %819 = vmatprep.subr.mxu0 0.0
    %820 = vmatpush1.msra.mxu0 0.0
    %821 = vmatprep.mubr.f32.mxu0 0.0
    %822 = vmatmul.mubr.f32.gmra.mrb[0].mxu0 %v755
    %v823 = vpop.f32.mrb[0].mxu0
    %v824 = vadd.f32 0.0, %v823
    %v825 = vpop.f32.mrb[0].mxu0
    %826 = vdwg.mxu0
    %827 = vrot.lane.b32.xlu0 %v207, 32
    %v828 = vpop.permute.xlu0 %827
    %v831 = vsel %vm684, %v746, 0
    %833 = vmatprep.subr.mxu0 0.0
    %834 = vmatpush1.msra.mxu0 %v828
    %835 = vmatprep.subr.mxu0 0.0
    %836 = vmatpush1.msra.mxu0 0.0
    %837 = vmatprep.subr.mxu0 0.0
    %838 = vmatpush1.msra.mxu0 0.0
    %839 = vmatprep.subr.mxu0 0.0
    %840 = vmatpush1.msra.mxu0 0.0
    %841 = vmatprep.subr.mxu0 0.0
    %842 = vmatpush1.msra.mxu0 0.0
    %843 = vmatprep.subr.mxu0 0.0
    %844 = vmatpush1.msra.mxu0 0.0
    %845 = vmatprep.subr.mxu0 0.0
    %846 = vmatpush1.msra.mxu0 0.0
    %847 = vmatprep.subr.mxu0 0.0
    %848 = vmatpush1.msra.mxu0 0.0
    %849 = vmatprep.subr.mxu0 0.0
    %850 = vmatpush1.msra.mxu0 0.0
    %851 = vmatprep.subr.mxu0 0.0
    %852 = vmatpush1.msra.mxu0 0.0
    %853 = vmatprep.subr.mxu0 0.0
    %854 = vmatpush1.msra.mxu0 0.0
    %855 = vmatprep.subr.mxu0 0.0
    %856 = vmatpush1.msra.mxu0 0.0
    %857 = vmatprep.subr.mxu0 0.0
    %858 = vmatpush1.msra.mxu0 0.0
    %859 = vmatprep.subr.mxu0 0.0
    %860 = vmatpush1.msra.mxu0 0.0
    %861 = vmatprep.subr.mxu0 0.0
    %862 = vmatpush1.msra.mxu0 0.0
    %863 = vmatprep.subr.mxu0 0.0
    %864 = vmatpush1.msra.mxu0 0.0
    %865 = vmatprep.subr.mxu0 0.0
    %866 = vmatpush1.msra.mxu0 0.0
    %867 = vmatprep.subr.mxu0 0.0
    %868 = vmatpush1.msra.mxu0 0.0
    %869 = vmatprep.subr.mxu0 0.0
    %870 = vmatpush1.msra.mxu0 0.0
    %871 = vmatprep.subr.mxu0 0.0
    %872 = vmatpush1.msra.mxu0 0.0
    %873 = vmatprep.subr.mxu0 0.0
    %874 = vmatpush1.msra.mxu0 0.0
    %875 = vmatprep.subr.mxu0 0.0
    %876 = vmatpush1.msra.mxu0 0.0
    %877 = vmatprep.subr.mxu0 0.0
    %878 = vmatpush1.msra.mxu0 0.0
    %879 = vmatprep.subr.mxu0 0.0
    %880 = vmatpush1.msra.mxu0 0.0
    %881 = vmatprep.subr.mxu0 0.0
    %882 = vmatpush1.msra.mxu0 0.0
    %883 = vmatprep.subr.mxu0 0.0
    %884 = vmatpush1.msra.mxu0 0.0
    %885 = vmatprep.subr.mxu0 0.0
    %886 = vmatpush1.msra.mxu0 0.0
    %887 = vmatprep.subr.mxu0 0.0
    %888 = vmatpush1.msra.mxu0 0.0
    %889 = vmatprep.subr.mxu0 0.0
    %890 = vmatpush1.msra.mxu0 0.0
    %891 = vmatprep.subr.mxu0 0.0
    %892 = vmatpush1.msra.mxu0 0.0
    %893 = vmatprep.subr.mxu0 0.0
    %894 = vmatpush1.msra.mxu0 0.0
    %895 = vmatprep.subr.mxu0 0.0
    %896 = vmatpush1.msra.mxu0 0.0
    %897 = vmatprep.mubr.f32.mxu0 0.0
    %898 = vmatmul.mubr.f32.gmra.mrb[0].mxu0 %v831
    %v899 = vpop.f32.mrb[0].mxu0
    %v900 = vadd.f32 0.0, %v899
    %v901 = vpop.f32.mrb[0].mxu0
    %902 = vdwg.mxu0
    %903 = vrot.lane.b32.xlu0 %v213, 32
    %v904 = vpop.permute.xlu0 %903
    %v907 = vsel %vm684, %v747, 0
    %909 = vmatprep.subr.mxu0 0.0
    %910 = vmatpush1.msra.mxu0 %v904
    %911 = vmatprep.subr.mxu0 0.0
    %912 = vmatpush1.msra.mxu0 0.0
    %913 = vmatprep.subr.mxu0 0.0
    %914 = vmatpush1.msra.mxu0 0.0
    %915 = vmatprep.subr.mxu0 0.0
    %916 = vmatpush1.msra.mxu0 0.0
    %917 = vmatprep.subr.mxu0 0.0
    %918 = vmatpush1.msra.mxu0 0.0
    %919 = vmatprep.subr.mxu0 0.0
    %920 = vmatpush1.msra.mxu0 0.0
    %921 = vmatprep.subr.mxu0 0.0
    %922 = vmatpush1.msra.mxu0 0.0
    %923 = vmatprep.subr.mxu0 0.0
    %924 = vmatpush1.msra.mxu0 0.0
    %925 = vmatprep.subr.mxu0 0.0
    %926 = vmatpush1.msra.mxu0 0.0
    %927 = vmatprep.subr.mxu0 0.0
    %928 = vmatpush1.msra.mxu0 0.0
    %929 = vmatprep.subr.mxu0 0.0
    %930 = vmatpush1.msra.mxu0 0.0
    %931 = vmatprep.subr.mxu0 0.0
    %932 = vmatpush1.msra.mxu0 0.0
    %933 = vmatprep.subr.mxu0 0.0
    %934 = vmatpush1.msra.mxu0 0.0
    %935 = vmatprep.subr.mxu0 0.0
    %936 = vmatpush1.msra.mxu0 0.0
    %937 = vmatprep.subr.mxu0 0.0
    %938 = vmatpush1.msra.mxu0 0.0
    %939 = vmatprep.subr.mxu0 0.0
    %940 = vmatpush1.msra.mxu0 0.0
    %941 = vmatprep.subr.mxu0 0.0
    %942 = vmatpush1.msra.mxu0 0.0
    %943 = vmatprep.subr.mxu0 0.0
    %944 = vmatpush1.msra.mxu0 0.0
    %945 = vmatprep.subr.mxu0 0.0
    %946 = vmatpush1.msra.mxu0 0.0
    %947 = vmatprep.subr.mxu0 0.0
    %948 = vmatpush1.msra.mxu0 0.0
    %949 = vmatprep.subr.mxu0 0.0
    %950 = vmatpush1.msra.mxu0 0.0
    %951 = vmatprep.subr.mxu0 0.0
    %952 = vmatpush1.msra.mxu0 0.0
    %953 = vmatprep.subr.mxu0 0.0
    %954 = vmatpush1.msra.mxu0 0.0
    %955 = vmatprep.subr.mxu0 0.0
    %956 = vmatpush1.msra.mxu0 0.0
    %957 = vmatprep.subr.mxu0 0.0
    %958 = vmatpush1.msra.mxu0 0.0
    %959 = vmatprep.subr.mxu0 0.0
    %960 = vmatpush1.msra.mxu0 0.0
    %961 = vmatprep.subr.mxu0 0.0
    %962 = vmatpush1.msra.mxu0 0.0
    %963 = vmatprep.subr.mxu0 0.0
    %964 = vmatpush1.msra.mxu0 0.0
    %965 = vmatprep.subr.mxu0 0.0
    %966 = vmatpush1.msra.mxu0 0.0
    %967 = vmatprep.subr.mxu0 0.0
    %968 = vmatpush1.msra.mxu0 0.0
    %969 = vmatprep.subr.mxu0 0.0
    %970 = vmatpush1.msra.mxu0 0.0
    %971 = vmatprep.subr.mxu0 0.0
    %972 = vmatpush1.msra.mxu0 0.0
    %973 = vmatprep.mubr.f32.mxu0 0.0
    %974 = vmatmul.mubr.f32.gmra.mrb[0].mxu0 %v907
    %v975 = vpop.f32.mrb[0].mxu0
    %v976 = vadd.f32 0.0, %v975
    %v977 = vpop.f32.mrb[0].mxu0
    %978 = vdwg.mxu0
    %979 = vrot.lane.b32.xlu0 %v216, 32
    %v980 = vpop.permute.xlu0 %979
    %v983 = vsel %vm684, %v748, 0
    %985 = vmatprep.subr.mxu0 0.0
    %986 = vmatpush1.msra.mxu0 %v980
    %987 = vmatprep.subr.mxu0 0.0
    %988 = vmatpush1.msra.mxu0 0.0
    %989 = vmatprep.subr.mxu0 0.0
    %990 = vmatpush1.msra.mxu0 0.0
    %991 = vmatprep.subr.mxu0 0.0
    %992 = vmatpush1.msra.mxu0 0.0
    %993 = vmatprep.subr.mxu0 0.0
    %994 = vmatpush1.msra.mxu0 0.0
    %995 = vmatprep.subr.mxu0 0.0
    %996 = vmatpush1.msra.mxu0 0.0
    %997 = vmatprep.subr.mxu0 0.0
    %998 = vmatpush1.msra.mxu0 0.0
    %999 = vmatprep.subr.mxu0 0.0
    %1000 = vmatpush1.msra.mxu0 0.0
    %1001 = vmatprep.subr.mxu0 0.0
    %1002 = vmatpush1.msra.mxu0 0.0
    %1003 = vmatprep.subr.mxu0 0.0
    %1004 = vmatpush1.msra.mxu0 0.0
    %1005 = vmatprep.subr.mxu0 0.0
    %1006 = vmatpush1.msra.mxu0 0.0
    %1007 = vmatprep.subr.mxu0 0.0
    %1008 = vmatpush1.msra.mxu0 0.0
    %1009 = vmatprep.subr.mxu0 0.0
    %1010 = vmatpush1.msra.mxu0 0.0
    %1011 = vmatprep.subr.mxu0 0.0
    %1012 = vmatpush1.msra.mxu0 0.0
    %1013 = vmatprep.subr.mxu0 0.0
    %1014 = vmatpush1.msra.mxu0 0.0
    %1015 = vmatprep.subr.mxu0 0.0
    %1016 = vmatpush1.msra.mxu0 0.0
    %1017 = vmatprep.subr.mxu0 0.0
    %1018 = vmatpush1.msra.mxu0 0.0
    %1019 = vmatprep.subr.mxu0 0.0
    %1020 = vmatpush1.msra.mxu0 0.0
    %1021 = vmatprep.subr.mxu0 0.0
    %1022 = vmatpush1.msra.mxu0 0.0
    %1023 = vmatprep.subr.mxu0 0.0
    %1024 = vmatpush1.msra.mxu0 0.0
    %1025 = vmatprep.subr.mxu0 0.0
    %1026 = vmatpush1.msra.mxu0 0.0
    %1027 = vmatprep.subr.mxu0 0.0
    %1028 = vmatpush1.msra.mxu0 0.0
    %1029 = vmatprep.subr.mxu0 0.0
    %1030 = vmatpush1.msra.mxu0 0.0
    %1031 = vmatprep.subr.mxu0 0.0
    %1032 = vmatpush1.msra.mxu0 0.0
    %1033 = vmatprep.subr.mxu0 0.0
    %1034 = vmatpush1.msra.mxu0 0.0
    %1035 = vmatprep.subr.mxu0 0.0
    %1036 = vmatpush1.msra.mxu0 0.0
    %1037 = vmatprep.subr.mxu0 0.0
    %1038 = vmatpush1.msra.mxu0 0.0
    %1039 = vmatprep.subr.mxu0 0.0
    %1040 = vmatpush1.msra.mxu0 0.0
    %1041 = vmatprep.subr.mxu0 0.0
    %1042 = vmatpush1.msra.mxu0 0.0
    %1043 = vmatprep.subr.mxu0 0.0
    %1044 = vmatpush1.msra.mxu0 0.0
    %1045 = vmatprep.subr.mxu0 0.0
    %1046 = vmatpush1.msra.mxu0 0.0
    %1047 = vmatprep.subr.mxu0 0.0
    %1048 = vmatpush1.msra.mxu0 0.0
    %1049 = vmatprep.mubr.f32.mxu0 0.0
    %1050 = vmatmul.mubr.f32.gmra.mrb[0].mxu0 %v983
    %v1051 = vpop.f32.mrb[0].mxu0
    %v1052 = vadd.f32 0.0, %v1051
    %v1053 = vpop.f32.mrb[0].mxu0
    %1054 = vdwg.mxu0
    %1055 = vrot.lane.b32.xlu0 %v223, 32
    %v1056 = vpop.permute.xlu0 %1055
    %v1059 = vsel %vm684, %v749, 0
    %1061 = vmatprep.subr.mxu0 0.0
    %1062 = vmatpush1.msra.mxu0 %v1056
    %1063 = vmatprep.subr.mxu0 0.0
    %1064 = vmatpush1.msra.mxu0 0.0
    %1065 = vmatprep.subr.mxu0 0.0
    %1066 = vmatpush1.msra.mxu0 0.0
    %1067 = vmatprep.subr.mxu0 0.0
    %1068 = vmatpush1.msra.mxu0 0.0
    %1069 = vmatprep.subr.mxu0 0.0
    %1070 = vmatpush1.msra.mxu0 0.0
    %1071 = vmatprep.subr.mxu0 0.0
    %1072 = vmatpush1.msra.mxu0 0.0
    %1073 = vmatprep.subr.mxu0 0.0
    %1074 = vmatpush1.msra.mxu0 0.0
    %1075 = vmatprep.subr.mxu0 0.0
    %1076 = vmatpush1.msra.mxu0 0.0
    %1077 = vmatprep.subr.mxu0 0.0
    %1078 = vmatpush1.msra.mxu0 0.0
    %1079 = vmatprep.subr.mxu0 0.0
    %1080 = vmatpush1.msra.mxu0 0.0
    %1081 = vmatprep.subr.mxu0 0.0
    %1082 = vmatpush1.msra.mxu0 0.0
    %1083 = vmatprep.subr.mxu0 0.0
    %1084 = vmatpush1.msra.mxu0 0.0
    %1085 = vmatprep.subr.mxu0 0.0
    %1086 = vmatpush1.msra.mxu0 0.0
    %1087 = vmatprep.subr.mxu0 0.0
    %1088 = vmatpush1.msra.mxu0 0.0
    %1089 = vmatprep.subr.mxu0 0.0
    %1090 = vmatpush1.msra.mxu0 0.0
    %1091 = vmatprep.subr.mxu0 0.0
    %1092 = vmatpush1.msra.mxu0 0.0
    %1093 = vmatprep.subr.mxu0 0.0
    %1094 = vmatpush1.msra.mxu0 0.0
    %1095 = vmatprep.subr.mxu0 0.0
    %1096 = vmatpush1.msra.mxu0 0.0
    %1097 = vmatprep.subr.mxu0 0.0
    %1098 = vmatpush1.msra.mxu0 0.0
    %1099 = vmatprep.subr.mxu0 0.0
    %1100 = vmatpush1.msra.mxu0 0.0
    %1101 = vmatprep.subr.mxu0 0.0
    %1102 = vmatpush1.msra.mxu0 0.0
    %1103 = vmatprep.subr.mxu0 0.0
    %1104 = vmatpush1.msra.mxu0 0.0
    %1105 = vmatprep.subr.mxu0 0.0
    %1106 = vmatpush1.msra.mxu0 0.0
    %1107 = vmatprep.subr.mxu0 0.0
    %1108 = vmatpush1.msra.mxu0 0.0
    %1109 = vmatprep.subr.mxu0 0.0
    %1110 = vmatpush1.msra.mxu0 0.0
    %1111 = vmatprep.subr.mxu0 0.0
    %1112 = vmatpush1.msra.mxu0 0.0
    %1113 = vmatprep.subr.mxu0 0.0
    %1114 = vmatpush1.msra.mxu0 0.0
    %1115 = vmatprep.subr.mxu0 0.0
    %1116 = vmatpush1.msra.mxu0 0.0
    %1117 = vmatprep.subr.mxu0 0.0
    %1118 = vmatpush1.msra.mxu0 0.0
    %1119 = vmatprep.subr.mxu0 0.0
    %1120 = vmatpush1.msra.mxu0 0.0
    %1121 = vmatprep.subr.mxu0 0.0
    %1122 = vmatpush1.msra.mxu0 0.0
    %1123 = vmatprep.subr.mxu0 0.0
    %1124 = vmatpush1.msra.mxu0 0.0
    %1125 = vmatprep.mubr.f32.mxu0 0.0
    %1126 = vmatmul.mubr.f32.gmra.mrb[0].mxu0 %v1059
    %v1127 = vpop.f32.mrb[0].mxu0
    %v1128 = vadd.f32 0.0, %v1127
    %v1129 = vpop.f32.mrb[0].mxu0
    %1130 = vdwg.mxu0
    %1131 = vrot.lane.b32.xlu0 %v226, 32
    %v1132 = vpop.permute.xlu0 %1131
    %v1135 = vsel %vm684, %v750, 0
    %1137 = vmatprep.subr.mxu0 0.0
    %1138 = vmatpush1.msra.mxu0 %v1132
    %1139 = vmatprep.subr.mxu0 0.0
    %1140 = vmatpush1.msra.mxu0 0.0
    %1141 = vmatprep.subr.mxu0 0.0
    %1142 = vmatpush1.msra.mxu0 0.0
    %1143 = vmatprep.subr.mxu0 0.0
    %1144 = vmatpush1.msra.mxu0 0.0
    %1145 = vmatprep.subr.mxu0 0.0
    %1146 = vmatpush1.msra.mxu0 0.0
    %1147 = vmatprep.subr.mxu0 0.0
    %1148 = vmatpush1.msra.mxu0 0.0
    %1149 = vmatprep.subr.mxu0 0.0
    %1150 = vmatpush1.msra.mxu0 0.0
    %1151 = vmatprep.subr.mxu0 0.0
    %1152 = vmatpush1.msra.mxu0 0.0
    %1153 = vmatprep.subr.mxu0 0.0
    %1154 = vmatpush1.msra.mxu0 0.0
    %1155 = vmatprep.subr.mxu0 0.0
    %1156 = vmatpush1.msra.mxu0 0.0
    %1157 = vmatprep.subr.mxu0 0.0
    %1158 = vmatpush1.msra.mxu0 0.0
    %1159 = vmatprep.subr.mxu0 0.0
    %1160 = vmatpush1.msra.mxu0 0.0
    %1161 = vmatprep.subr.mxu0 0.0
    %1162 = vmatpush1.msra.mxu0 0.0
    %1163 = vmatprep.subr.mxu0 0.0
    %1164 = vmatpush1.msra.mxu0 0.0
    %1165 = vmatprep.subr.mxu0 0.0
    %1166 = vmatpush1.msra.mxu0 0.0
    %1167 = vmatprep.subr.mxu0 0.0
    %1168 = vmatpush1.msra.mxu0 0.0
    %1169 = vmatprep.subr.mxu0 0.0
    %1170 = vmatpush1.msra.mxu0 0.0
    %1171 = vmatprep.subr.mxu0 0.0
    %1172 = vmatpush1.msra.mxu0 0.0
    %1173 = vmatprep.subr.mxu0 0.0
    %1174 = vmatpush1.msra.mxu0 0.0
    %1175 = vmatprep.subr.mxu0 0.0
    %1176 = vmatpush1.msra.mxu0 0.0
    %1177 = vmatprep.subr.mxu0 0.0
    %1178 = vmatpush1.msra.mxu0 0.0
    %1179 = vmatprep.subr.mxu0 0.0
    %1180 = vmatpush1.msra.mxu0 0.0
    %1181 = vmatprep.subr.mxu0 0.0
    %1182 = vmatpush1.msra.mxu0 0.0
    %1183 = vmatprep.subr.mxu0 0.0
    %1184 = vmatpush1.msra.mxu0 0.0
    %1185 = vmatprep.subr.mxu0 0.0
    %1186 = vmatpush1.msra.mxu0 0.0
    %1187 = vmatprep.subr.mxu0 0.0
    %1188 = vmatpush1.msra.mxu0 0.0
    %1189 = vmatprep.subr.mxu0 0.0
    %1190 = vmatpush1.msra.mxu0 0.0
    %1191 = vmatprep.subr.mxu0 0.0
    %1192 = vmatpush1.msra.mxu0 0.0
    %1193 = vmatprep.subr.mxu0 0.0
    %1194 = vmatpush1.msra.mxu0 0.0
    %1195 = vmatprep.subr.mxu0 0.0
    %1196 = vmatpush1.msra.mxu0 0.0
    %1197 = vmatprep.subr.mxu0 0.0
    %1198 = vmatpush1.msra.mxu0 0.0
    %1199 = vmatprep.subr.mxu0 0.0
    %1200 = vmatpush1.msra.mxu0 0.0
    %1201 = vmatprep.mubr.f32.mxu0 0.0
    %1202 = vmatmul.mubr.f32.gmra.mrb[0].mxu0 %v1135
    %v1203 = vpop.f32.mrb[0].mxu0
    %v1204 = vadd.f32 0.0, %v1203
    %v1205 = vpop.f32.mrb[0].mxu0
    %1206 = vdwg.mxu0
    %1209 = vrot.lane.b32.xlu0 %v976, 16
    %v1210 = vpop.permute.xlu0 %1209
    %1211 = vrot.lane.b32.xlu0 %v1052, 16
    %v1212 = vpop.permute.xlu0 %1211
    %1217 = vrot.lane.b32.xlu0 %v1128, 32
    %v1218 = vpop.permute.xlu0 %1217
    %1219 = vrot.lane.b32.xlu0 %v1204, 32
    %v1220 = vpop.permute.xlu0 %1219
    %v1223 = vsel %vm229, %v824, %v1210
    %v1224 = vsel %vm229, %v900, %v1212
    %vm1225 = vcmask 261120
    %v1226 = vsel %vm1225, %v1223, %v1218
    %v1227 = vsel %vm1225, %v1224, %v1220
    %v1229 = vsel %vm81, %v1226, 0
    %v1232 = vsel %vm81, %v1227, 0
    %1234 = vmatprep.subr.mxu0 0.0
    %1235 = vmatpush1.msra.mxu0 %v27
    %1236 = vmatprep.subr.mxu0 0.0
    %1237 = vmatpush1.msra.mxu0 %v28
    %1238 = vmatprep.subr.mxu0 0.0
    %1239 = vmatpush1.msra.mxu0 %v29
    %1240 = vmatprep.subr.mxu0 0.0
    %1241 = vmatpush1.msra.mxu0 %v30
    %1242 = vmatprep.subr.mxu0 0.0
    %1243 = vmatpush1.msra.mxu0 %v31
    %1244 = vmatprep.subr.mxu0 0.0
    %1245 = vmatpush1.msra.mxu0 %v32
    %1246 = vmatprep.subr.mxu0 0.0
    %1247 = vmatpush1.msra.mxu0 0.0
    %1248 = vmatprep.subr.mxu0 0.0
    %1249 = vmatpush1.msra.mxu0 0.0
    %1250 = vmatprep.subr.mxu0 0.0
    %1251 = vmatpush1.msra.mxu0 0.0
    %1252 = vmatprep.subr.mxu0 0.0
    %1253 = vmatpush1.msra.mxu0 0.0
    %1254 = vmatprep.subr.mxu0 0.0
    %1255 = vmatpush1.msra.mxu0 0.0
    %1256 = vmatprep.subr.mxu0 0.0
    %1257 = vmatpush1.msra.mxu0 0.0
    %1258 = vmatprep.subr.mxu0 0.0
    %1259 = vmatpush1.msra.mxu0 0.0
    %1260 = vmatprep.subr.mxu0 0.0
    %1261 = vmatpush1.msra.mxu0 0.0
    %1262 = vmatprep.subr.mxu0 0.0
    %1263 = vmatpush1.msra.mxu0 0.0
    %1264 = vmatprep.subr.mxu0 0.0
    %1265 = vmatpush1.msra.mxu0 0.0
    %1266 = vmatprep.subr.mxu0 0.0
    %1267 = vmatpush1.msra.mxu0 0.0
    %1268 = vmatprep.subr.mxu0 0.0
    %1269 = vmatpush1.msra.mxu0 0.0
    %1270 = vmatprep.subr.mxu0 0.0
    %1271 = vmatpush1.msra.mxu0 0.0
    %1272 = vmatprep.subr.mxu0 0.0
    %1273 = vmatpush1.msra.mxu0 0.0
    %1274 = vmatprep.subr.mxu0 0.0
    %1275 = vmatpush1.msra.mxu0 0.0
    %1276 = vmatprep.subr.mxu0 0.0
    %1277 = vmatpush1.msra.mxu0 0.0
    %1278 = vmatprep.subr.mxu0 0.0
    %1279 = vmatpush1.msra.mxu0 0.0
    %1280 = vmatprep.subr.mxu0 0.0
    %1281 = vmatpush1.msra.mxu0 0.0
    %1282 = vmatprep.subr.mxu0 0.0
    %1283 = vmatpush1.msra.mxu0 0.0
    %1284 = vmatprep.subr.mxu0 0.0
    %1285 = vmatpush1.msra.mxu0 0.0
    %1286 = vmatprep.subr.mxu0 0.0
    %1287 = vmatpush1.msra.mxu0 0.0
    %1288 = vmatprep.subr.mxu0 0.0
    %1289 = vmatpush1.msra.mxu0 0.0
    %1290 = vmatprep.subr.mxu0 0.0
    %1291 = vmatpush1.msra.mxu0 0.0
    %1292 = vmatprep.subr.mxu0 0.0
    %1293 = vmatpush1.msra.mxu0 0.0
    %1294 = vmatprep.subr.mxu0 0.0
    %1295 = vmatpush1.msra.mxu0 0.0
    %1296 = vmatprep.subr.mxu0 0.0
    %1297 = vmatpush1.msra.mxu0 0.0
    %1298 = vmatprep.mubr.f32.mxu0 0.0
    %1299 = vmatmul.mubr.f32.gmra.mrb[0].mxu0 %v1229
    %v1300 = vpop.f32.mrb[0].mxu0
    %v1301 = vadd.f32 %v73, %v1300
    %v1302 = vpop.f32.mrb[0].mxu0
    %1303 = vmatprep.mubr.f32.mxu0 0.0
    %1304 = vmatmul.mubr.f32.gmra.mrb[0].mxu0 %v1232
    %v1305 = vpop.f32.mrb[0].mxu0
    %v1306 = vadd.f32 %v73, %v1305
    %v1307 = vpop.f32.mrb[0].mxu0
    %1308 = vdwg.mxu0
    %v1309 = vadd.f32 %v115, %v1301
    %v1310 = vadd.f32 %v116, %v1306
    %v1311 = vsel %vm81, %v1309, 0.0
    %1312 = vadd.xlane.f32.xlu0 %v1311
    %v1313 = vpop.xlane.xlu0 %1312
    %v1314 = vsel %vm81, %v1310, 0.0
    %1315 = vadd.xlane.f32.xlu0 %v1314
    %v1316 = vpop.xlane.xlu0 %1315
    %v1317 = vmul.f32 %v1313, %v88
    %v1318 = vmul.f32 %v1316, %v88
    %v1319 = vmul.f32 %v1309, %v1309
    %v1320 = vmul.f32 %v1310, %v1310
    %v1321 = vsel %vm81, %v1319, 0.0
    %1322 = vadd.xlane.f32.xlu0 %v1321
    %v1323 = vpop.xlane.xlu0 %1322
    %v1324 = vsel %vm81, %v1320, 0.0
    %1325 = vadd.xlane.f32.xlu0 %v1324
    %v1326 = vpop.xlane.xlu0 %1325
    %v1327 = vmul.f32 %v1323, %v88
    %v1328 = vmul.f32 %v1326, %v88
    %v1329 = vmul.f32 %v1317, %v1317
    %v1330 = vmul.f32 %v1318, %v1318
    %v1331 = vsub.f32 %v1327, %v1329
    %v1332 = vsub.f32 %v1328, %v1330
    %v1333 = vsub.f32 %v1309, %v1317
    %v1334 = vsub.f32 %v1310, %v1318
    %v1335 = vadd.f32 %v1331, 1e-05
    %v1336 = vadd.f32 %v1332, 1e-05
    %v1337 = vrsqrt.pop %v1335
    %v1338 = vrsqrt.pop %v1336
    %v1339 = vmul.f32 %v1333, %v1337
    %v1340 = vmul.f32 %v1334, %v1338
    %v1341 = vmul.f32 %v1339, %v74
    %v1342 = vmul.f32 %v1340, %v74
    %v1343 = vadd.f32 %v1341, %v75
    %v1344 = vadd.f32 %v1342, %v75
    %v1346 = vlaneseq
    %v1347 = vshrl.u32 %v1346, 7
    %v1348 = vsub.s32 0, %v1347
    %v1349 = vrot.slane %v77, %v1348
    %v1350 = vlaneseq
    %v1351 = vshrl.u32 %v1350, 7
    %v1352 = vsub.s32 1, %v1351
    %v1353 = vrot.slane %v77, %v1352
    %v1357 = vsel %vm81, %v1343, 0
    %v1360 = vsel %vm81, %v1344, 0
    %1362 = vmatprep.subr.mxu0 %v34
    %1363 = vmatpush1.msra.mxu0 %v33
    %1364 = vmatprep.subr.mxu0 %v36
    %1365 = vmatpush1.msra.mxu0 %v35
    %1366 = vmatprep.subr.mxu0 %v38
    %1367 = vmatpush1.msra.mxu0 %v37
    %1368 = vmatprep.subr.mxu0 %v40
    %1369 = vmatpush1.msra.mxu0 %v39
    %1370 = vmatprep.subr.mxu0 %v42
    %1371 = vmatpush1.msra.mxu0 %v41
    %1372 = vmatprep.subr.mxu0 %v44
    %1373 = vmatpush1.msra.mxu0 %v43
    %1374 = vmatprep.subr.mxu0 0.0
    %1375 = vmatpush1.msra.mxu0 0.0
    %1376 = vmatprep.subr.mxu0 0.0
    %1377 = vmatpush1.msra.mxu0 0.0
    %1378 = vmatprep.subr.mxu0 0.0
    %1379 = vmatpush1.msra.mxu0 0.0
    %1380 = vmatprep.subr.mxu0 0.0
    %1381 = vmatpush1.msra.mxu0 0.0
    %1382 = vmatprep.subr.mxu0 0.0
    %1383 = vmatpush1.msra.mxu0 0.0
    %1384 = vmatprep.subr.mxu0 0.0
    %1385 = vmatpush1.msra.mxu0 0.0
    %1386 = vmatprep.subr.mxu0 0.0
    %1387 = vmatpush1.msra.mxu0 0.0
    %1388 = vmatprep.subr.mxu0 0.0
    %1389 = vmatpush1.msra.mxu0 0.0
    %1390 = vmatprep.subr.mxu0 0.0
    %1391 = vmatpush1.msra.mxu0 0.0
    %1392 = vmatprep.subr.mxu0 0.0
    %1393 = vmatpush1.msra.mxu0 0.0
    %1394 = vmatprep.subr.mxu0 0.0
    %1395 = vmatpush1.msra.mxu0 0.0
    %1396 = vmatprep.subr.mxu0 0.0
    %1397 = vmatpush1.msra.mxu0 0.0
    %1398 = vmatprep.subr.mxu0 0.0
    %1399 = vmatpush1.msra.mxu0 0.0
    %1400 = vmatprep.subr.mxu0 0.0
    %1401 = vmatpush1.msra.mxu0 0.0
    %1402 = vmatprep.subr.mxu0 0.0
    %1403 = vmatpush1.msra.mxu0 0.0
    %1404 = vmatprep.subr.mxu0 0.0
    %1405 = vmatpush1.msra.mxu0 0.0
    %1406 = vmatprep.subr.mxu0 0.0
    %1407 = vmatpush1.msra.mxu0 0.0
    %1408 = vmatprep.subr.mxu0 0.0
    %1409 = vmatpush1.msra.mxu0 0.0
    %1410 = vmatprep.subr.mxu0 0.0
    %1411 = vmatpush1.msra.mxu0 0.0
    %1412 = vmatprep.subr.mxu0 0.0
    %1413 = vmatpush1.msra.mxu0 0.0
    %1414 = vmatprep.subr.mxu0 0.0
    %1415 = vmatpush1.msra.mxu0 0.0
    %1416 = vmatprep.subr.mxu0 0.0
    %1417 = vmatpush1.msra.mxu0 0.0
    %1418 = vmatprep.subr.mxu0 0.0
    %1419 = vmatpush1.msra.mxu0 0.0
    %1420 = vmatprep.subr.mxu0 0.0
    %1421 = vmatpush1.msra.mxu0 0.0
    %1422 = vmatprep.subr.mxu0 0.0
    %1423 = vmatpush1.msra.mxu0 0.0
    %1424 = vmatprep.subr.mxu0 0.0
    %1425 = vmatpush1.msra.mxu0 0.0
    %1426 = vmatprep.mubr.f32.mxu0 0.0
    %1427 = vmatmul.mubr.f32.gmra.mrb[0].mxu0 %v1357
    %v1428 = vpop.f32.mrb[0].mxu0
    %v1429 = vadd.f32 %v1349, %v1428
    %v1430 = vpop.f32.mrb[0].mxu0
    %v1431 = vadd.f32 %v1353, %v1430
    %1432 = vmatprep.mubr.f32.mxu0 0.0
    %1433 = vmatmul.mubr.f32.gmra.mrb[0].mxu0 %v1360
    %v1434 = vpop.f32.mrb[0].mxu0
    %v1435 = vadd.f32 %v1349, %v1434
    %v1436 = vpop.f32.mrb[0].mxu0
    %v1437 = vadd.f32 %v1353, %v1436
    %1438 = vdwg.mxu0
    %v1439 = vmul.f32 %v1429, %v1429
    %v1440 = vmul.f32 %v1431, %v1431
    %v1441 = vmul.f32 %v1435, %v1435
    %v1442 = vmul.f32 %v1437, %v1437
    %v1443 = vmul.f32 %v1429, %v1439
    %v1444 = vmul.f32 %v1431, %v1440
    %v1445 = vmul.f32 %v1435, %v1441
    %v1446 = vmul.f32 %v1437, %v1442
    %v1447 = vmul.f32 %v1443, 0.044715
    %v1448 = vmul.f32 %v1444, 0.044715
    %v1449 = vmul.f32 %v1445, 0.044715
    %v1450 = vmul.f32 %v1446, 0.044715
    %v1451 = vadd.f32 %v1429, %v1447
    %v1452 = vadd.f32 %v1431, %v1448
    %v1453 = vadd.f32 %v1435, %v1449
    %v1454 = vadd.f32 %v1437, %v1450
    %v1455 = vmul.f32 %v1451, 0.7978846
    %v1456 = vmul.f32 %v1452, 0.7978846
    %v1457 = vmul.f32 %v1453, 0.7978846
    %v1458 = vmul.f32 %v1454, 0.7978846
    %v1459 = vtanh.pop %v1455
    %v1460 = vtanh.pop %v1456
    %v1461 = vtanh.pop %v1457
    %v1462 = vtanh.pop %v1458
    %v1463 = vadd.f32 %v1459, 1.0
    %v1464 = vadd.f32 %v1460, 1.0
    %v1465 = vadd.f32 %v1461, 1.0
    %v1466 = vadd.f32 %v1462, 1.0
    %v1467 = vmul.f32 %v1463, 0.5
    %v1468 = vmul.f32 %v1464, 0.5
    %v1469 = vmul.f32 %v1465, 0.5
    %v1470 = vmul.f32 %v1466, 0.5
    %v1471 = vmul.f32 %v1429, %v1467
    %v1472 = vmul.f32 %v1431, %v1468
    %v1473 = vmul.f32 %v1435, %v1469
    %v1474 = vmul.f32 %v1437, %v1470
    %vm1475 = vcmask 523264
    %v1477 = vsel %vm1475, %v1472, 0
    %v1480 = vsel %vm1475, %v1474, 0
    %1482 = vmatprep.subr.mxu0 0.0
    %1483 = vmatpush1.msra.mxu0 %v45
    %1484 = vmatprep.subr.mxu0 0.0
    %1485 = vmatpush1.msra.mxu0 %v46
    %1486 = vmatprep.subr.mxu0 0.0
    %1487 = vmatpush1.msra.mxu0 %v47
    %1488 = vmatprep.subr.mxu0 0.0
    %1489 = vmatpush1.msra.mxu0 %v48
    %1490 = vmatprep.subr.mxu0 0.0
    %1491 = vmatpush1.msra.mxu0 %v49
    %1492 = vmatprep.subr.mxu0 0.0
    %1493 = vmatpush1.msra.mxu0 %v50
    %1494 = vmatprep.subr.mxu0 0.0
    %1495 = vmatpush1.msra.mxu0 %v51
    %1496 = vmatprep.subr.mxu0 0.0
    %1497 = vmatpush1.msra.mxu0 %v52
    %1498 = vmatprep.subr.mxu0 0.0
    %1499 = vmatpush1.msra.mxu0 %v53
    %1500 = vmatprep.subr.mxu0 0.0
    %1501 = vmatpush1.msra.mxu0 %v54
    %1502 = vmatprep.subr.mxu0 0.0
    %1503 = vmatpush1.msra.mxu0 %v55
    %1504 = vmatprep.subr.mxu0 0.0
    %1505 = vmatpush1.msra.mxu0 %v56
    %1506 = vmatprep.subr.mxu0 0.0
    %1507 = vmatpush1.msra.mxu0 %v57
    %1508 = vmatprep.subr.mxu0 0.0
    %1509 = vmatpush1.msra.mxu0 %v58
    %1510 = vmatprep.subr.mxu0 0.0
    %1511 = vmatpush1.msra.mxu0 %v59
    %1512 = vmatprep.subr.mxu0 0.0
    %1513 = vmatpush1.msra.mxu0 %v60
    %1514 = vmatprep.subr.mxu0 0.0
    %1515 = vmatpush1.msra.mxu0 %v61
    %1516 = vmatprep.subr.mxu0 0.0
    %1517 = vmatpush1.msra.mxu0 %v62
    %1518 = vmatprep.subr.mxu0 0.0
    %1519 = vmatpush1.msra.mxu0 %v63
    %1520 = vmatprep.subr.mxu0 0.0
    %1521 = vmatpush1.msra.mxu0 %v64
    %1522 = vmatprep.subr.mxu0 0.0
    %1523 = vmatpush1.msra.mxu0 %v65
    %1524 = vmatprep.subr.mxu0 0.0
    %1525 = vmatpush1.msra.mxu0 %v66
    %1526 = vmatprep.subr.mxu0 0.0
    %1527 = vmatpush1.msra.mxu0 %v67
    %1528 = vmatprep.subr.mxu0 0.0
    %1529 = vmatpush1.msra.mxu0 %v68
    %1530 = vmatprep.subr.mxu0 0.0
    %1531 = vmatpush1.msra.mxu0 0.0
    %1532 = vmatprep.subr.mxu0 0.0
    %1533 = vmatpush1.msra.mxu0 0.0
    %1534 = vmatprep.subr.mxu0 0.0
    %1535 = vmatpush1.msra.mxu0 0.0
    %1536 = vmatprep.subr.mxu0 0.0
    %1537 = vmatpush1.msra.mxu0 0.0
    %1538 = vmatprep.subr.mxu0 0.0
    %1539 = vmatpush1.msra.mxu0 0.0
    %1540 = vmatprep.subr.mxu0 0.0
    %1541 = vmatpush1.msra.mxu0 0.0
    %1542 = vmatprep.subr.mxu0 0.0
    %1543 = vmatpush1.msra.mxu0 0.0
    %1544 = vmatprep.subr.mxu0 0.0
    %1545 = vmatpush1.msra.mxu0 0.0
    %1546 = vmatprep.mubr.f32.mxu0 %v1477
    %1547 = vmatmul.mubr.f32.gmra.mrb[0].mxu0 %v1471
    %v1548 = vpop.f32.mrb[0].mxu0
    %v1549 = vadd.f32 %v78, %v1548
    %v1550 = vpop.f32.mrb[0].mxu0
    %1551 = vmatprep.mubr.f32.mxu0 %v1480
    %1552 = vmatmul.mubr.f32.gmra.mrb[0].mxu0 %v1473
    %v1553 = vpop.f32.mrb[0].mxu0
    %v1554 = vadd.f32 %v78, %v1553
    %v1555 = vpop.f32.mrb[0].mxu0
    %1556 = vdwg.mxu0
    %v1557 = vadd.f32 %v1309, %v1549
    %v1558 = vadd.f32 %v1310, %v1554
    %1559 = vst.msk [vmem:[#allocation2] sm:$0xff] %vm81, %v1557
    %1560 = vst.msk [vmem:[#allocation2 + $0x8] sm:$0xff] %vm81, %v1558
    // Predicated region
    $region14: #{tpu_custom_call.1} parent=1 // pred_check
      _
    $region15: #{tpu_custom_call.1} parent=1 // pred_check_branch
      %1562 = sbr.rel (0) target = $region17
    $region16: #{tpu_custom_call.1} parent=1 // pred_region
      %s1564 = ssub.s32 256, 256
      %1565 = vsyncadd [#allocation3], %s1564
      %s1566 = sshll.u32 [#allocation2], 4
      %s1567 = int_to_ptr.vmem [resolvable:$true] %s1566
      %1572 = dma.vmem_to_hbm [thread:$0]  %s1567, 256, %s3, [#allocation3], 128, 128, 8
    $region17: #{tpu_custom_call.1} parent=1 // pred_fallthru
      _
    // Predicated region
    $region18: #{tpu_custom_call.1} parent=1 // pred_check
      _
    $region19: #{tpu_custom_call.1} parent=1 // pred_check_branch
      %1574 = sbr.rel (0) target = $region21
    $region20: #{tpu_custom_call.1} parent=1 // pred_region
      %1575 = dma.done [#allocation3], 256
    $region21: #{tpu_custom_call.1} parent=1 // pred_fallthru
      _
    %1576 = vsyncpa [#allocation3], 1

</llo_original>
